<compile_context>
chip_gen: v7x
topology: tpu7x:2x2x1
jax: 0.10.0
libtpu: 0.0.40
codegen_flags: <defaults>
</compile_context>

<pallas_src>
import math
from functools import partial

import numpy as np
import jax
import jax.numpy as jnp
from jax import lax
from jax.experimental import pallas as pl
from jax.experimental.pallas import tpu as pltpu


_PARAM_ORDER = ('rms_w', 'w_inT', 'conv_wT', 'conv_b', 'wx_T',
                'w_dtT', 'b_dt', 'A_T', 'Dp', 'w_outT')


# --------------------------------------------------------------------------- #
# Pallas kernel: one prenorm Mamba block (RMSNorm + Mamba mixer) per batch block
# --------------------------------------------------------------------------- #
def _mamba_block_kernel(eps, reverse,
                        hid_ref, res_ref,
                        rms_w_ref, w_in_ref, conv_wT_ref, conv_b_ref,
                        wx_ref, w_dtT_ref, b_dt_ref, A_T_ref, Dp_ref, w_outT_ref,
                        hid_out_ref, res_out_ref,
                        dA_ref, st_ref):
    f32, bf16 = jnp.float32, jnp.bfloat16

    Bblk, L, D = hid_ref.shape
    BL = Bblk * L
    d_conv = conv_wT_ref.shape[0]
    d_state, d_inner = A_T_ref.shape

    hid = hid_ref[...].reshape(BL, D)
    res = res_ref[...].reshape(BL, D)

    # ---- Block: residual add + RMSNorm ----
    resid = hid + res
    var = jnp.mean(resid * resid, axis=-1, keepdims=True)
    hn = resid * lax.rsqrt(var + eps) * rms_w_ref[...]

    # ---- fused in_proj: one (BL, D) @ (D, 2*d_inner) matmul, bf16 in / f32 acc ----
    xz = jnp.dot(hn.astype(bf16), w_in_ref[...], preferred_element_type=f32)
    x = xz[:, :d_inner]
    z = xz[:, d_inner:]

    # ---- depthwise conv along L: causal (forward) / anti-causal (reverse) ----
    # pltpu.roll on the sublane axis + iota row-mask; the mask also zeroes rows
    # whose shifted source crosses a batch boundary in the folded (BL, .) layout.
    cw = conv_wT_ref[...]                                          # (d_conv, d_inner)
    l_pos = lax.broadcasted_iota(jnp.int32, (BL, 1), 0) % L
    xc = jnp.zeros((BL, d_inner), f32) + conv_b_ref[...]
    for j in range(d_conv):
        w_row = cw[d_conv - 1 - j:d_conv - j, :]                   # (1, d_inner)
        if j == 0:
            xs = x
        else:
            shift = (BL - j) if reverse else j                     # xs[r] = x[r +/- j]
            xs = pltpu.roll(x, shift, axis=0)
            valid = (l_pos < L - j) if reverse else (l_pos >= j)
            xs = jnp.where(valid, xs, 0.0)
        xc = xc + xs * w_row
    u = xc * jax.nn.sigmoid(xc)                                    # SiLU

    # ---- fused x_proj: columns laid out [B | C | dt] ----
    bcd = jnp.dot(u.astype(bf16), wx_ref[...], preferred_element_type=f32)
    Bm = bcd[:, :d_state]                                          # (BL, d_state)
    Cm = bcd[:, d_state:2 * d_state]                               # (BL, d_state)
    dt_in = bcd[:, 2 * d_state:]                                   # (BL, dt_rank)

    dt = jnp.dot(dt_in.astype(bf16), w_dtT_ref[...],
                 preferred_element_type=f32) + b_dt_ref[...]
    delta = jax.nn.softplus(dt)                                    # (BL, d_inner), f32

    # ---- selective scan: batched precompute, serial chain is a single FMA ----
    dA_ref[...] = jnp.exp(delta[:, None, :] * A_T_ref[...][None, :, :])   # (BL, n, d_inner)
    du = delta * u
    st_ref[...] = du[:, None, :] * Bm[:, :, None]                  # dBu; becomes state history

    for b in range(Bblk):
        base = b * L

        def step(t, state, base=base):
            l = base + (L - 1 - t if reverse else t)
            s_new = dA_ref[l] * state + st_ref[l]
            st_ref[l] = s_new                                      # store state history in place
            return s_new

        lax.fori_loop(0, L, step, jnp.zeros((d_state, d_inner), f32),
                      unroll=(L <= 16))

    # batched C-contraction + skip + SiLU(z) gate + out_proj
    y = jnp.sum(st_ref[...] * Cm[:, :, None], axis=1)              # (BL, d_inner)
    y = y + u * Dp_ref[...]
    y = y * (z * jax.nn.sigmoid(z))
    out = jnp.dot(y.astype(bf16), w_outT_ref[...], preferred_element_type=f32)

    hid_out_ref[...] = out.reshape(Bblk, L, D)
    res_out_ref[...] = resid.reshape(Bblk, L, D)


def _pick_bblk(B, L):
    """Batch elements per grid step: aim for >=256 matmul rows, Bblk | B."""
    bblk = min(B, max(1, -(-256 // L)))
    while bblk > 1 and B % bblk != 0:
        bblk -= 1
    return bblk


def mamba_block_layer(hid, res, kp, eps, reverse):
    """One Create_Block layer: (hidden, residual) -> (new_hidden, new_residual)."""
    B, L, D = hid.shape
    bblk = _pick_bblk(B, L)
    d_state, d_inner = kp['A_T'].shape
    weights = [kp[k] for k in _PARAM_ORDER]

    act_spec = pl.BlockSpec((bblk, L, D), lambda g: (g, 0, 0))
    w_specs = [pl.BlockSpec(w.shape, (lambda g, nd=w.ndim: (0,) * nd)) for w in weights]

    out_shape = (jax.ShapeDtypeStruct((B, L, D), jnp.float32),
                 jax.ShapeDtypeStruct((B, L, D), jnp.float32))

    return pl.pallas_call(
        partial(_mamba_block_kernel, eps, reverse),
        grid=(B // bblk,),
        in_specs=[act_spec, act_spec] + w_specs,
        out_specs=(act_spec, act_spec),
        out_shape=out_shape,
        scratch_shapes=[pltpu.VMEM((bblk * L, d_state, d_inner), jnp.float32),
                        pltpu.VMEM((bblk * L, d_state, d_inner), jnp.float32)],
        compiler_params=pltpu.CompilerParams(dimension_semantics=("parallel",)),
    )(hid, res, *weights)


def bimamba_forward(x, fwd_params, bwd_params, eps):
    """BiMambaBlock.forward. The backward direction's flips are folded into the
    kernel (anti-causal conv + reverse-time scan), so no jnp.flip HBM passes."""
    xf, rf = x, jnp.zeros_like(x)                    # residual=None ≡ zero residual
    for p in fwd_params:
        xf, rf = mamba_block_layer(xf, rf, p, eps, reverse=False)
    y_forward = xf + rf

    xb, rb = x, jnp.zeros_like(x)
    for p in bwd_params:
        xb, rb = mamba_block_layer(xb, rb, p, eps, reverse=True)
    y_backward = xb + rb

    return jnp.concatenate([y_forward, y_backward], axis=-1)


# --------------------------------------------------------------------------- #
# Deterministic synthetic parameters (shapes follow Mamba.__init__)
# --------------------------------------------------------------------------- #
def init_block_params(key, d_model, d_state, d_conv, expand):
    d_inner = expand * d_model
    dt_rank = math.ceil(d_model / 16)
    ks = jax.random.split(key, 7)

    w_in = jax.random.normal(ks[0], (2 * d_inner, d_model), jnp.float32) * (d_model ** -0.5)
    conv_w = jax.random.normal(ks[1], (d_inner, 1, d_conv), jnp.float32) * (d_conv ** -0.5)
    conv_b = jax.random.normal(ks[2], (d_inner,), jnp.float32) * 0.02
    w_xproj = jax.random.normal(ks[3], (dt_rank + 2 * d_state, d_inner), jnp.float32) * (d_inner ** -0.5)
    w_dt = jax.random.normal(ks[4], (d_inner, dt_rank), jnp.float32) * (dt_rank ** -0.5)
    dt = jnp.exp(jax.random.uniform(ks[5], (d_inner,), jnp.float32,
                                    minval=math.log(1e-3), maxval=math.log(1e-1)))
    b_dt = dt + jnp.log(-jnp.expm1(-dt))                  # inverse softplus (Mamba dt init)
    A_log = jnp.log(jnp.tile(jnp.arange(1, d_state + 1, dtype=jnp.float32)[None, :], (d_inner, 1)))
    D_param = jnp.ones((d_inner,), jnp.float32)
    w_out = jax.random.normal(ks[6], (d_model, d_inner), jnp.float32) * (d_inner ** -0.5)
    rms_w = jnp.ones((d_model,), jnp.float32)

    wx_dt = w_xproj[:dt_rank]
    wx_B = w_xproj[dt_rank:dt_rank + d_state]
    wx_C = w_xproj[dt_rank + d_state:]

    bf16 = jnp.bfloat16
    # kernel layout: fused / pre-transposed weights; matmul weights stored bf16
    return {
        'rms_w':  rms_w.reshape(1, d_model),
        'w_inT':  w_in.T.astype(bf16),                                      # (D, 2*d_inner) [x|z]
        'conv_wT': conv_w[:, 0, :].T,                                       # (d_conv, d_inner)
        'conv_b': conv_b.reshape(1, d_inner),
        'wx_T':   jnp.concatenate([wx_B, wx_C, wx_dt], axis=0).T.astype(bf16),  # (d_inner, 2n+r)
        'w_dtT':  w_dt.T.astype(bf16),                                      # (dt_rank, d_inner)
        'b_dt':   b_dt.reshape(1, d_inner),
        'A_T':    (-jnp.exp(A_log)).T,                                      # (d_state, d_inner)
        'Dp':     D_param.reshape(1, d_inner),
        'w_outT': w_out.T.astype(bf16),                                     # (d_inner, D)
    }


# --------------------------------------------------------------------------- #
# Pure-JAX reference (flip-based, f32 activations) for validation
# --------------------------------------------------------------------------- #
def _mamba_block_ref(hid, res, p, eps):
    d_state, d_inner = p['A_T'].shape
    resid = hid + res
    var = jnp.mean(resid * resid, axis=-1, keepdims=True)
    hn = resid * lax.rsqrt(var + eps) * p['rms_w']
    xz = jnp.einsum('bld,de->ble', hn, p['w_inT'])
    x, z = xz[..., :d_inner], xz[..., d_inner:]
    Bsz, L, _ = x.shape
    d_conv = p['conv_wT'].shape[0]
    xpad = jnp.concatenate([jnp.zeros((Bsz, d_conv - 1, d_inner), x.dtype), x], axis=1)
    xc = jnp.zeros_like(x) + p['conv_b']
    for k in range(d_conv):
        xc = xc + xpad[:, k:k + L, :] * p['conv_wT'][k][None, None, :]
    u = xc * jax.nn.sigmoid(xc)
    bcd = jnp.einsum('ble,ek->blk', u, p['wx_T'])
    Bm = bcd[..., :d_state]
    Cm = bcd[..., d_state:2 * d_state]
    dt_in = bcd[..., 2 * d_state:]
    dt = jnp.einsum('blr,re->ble', dt_in, p['w_dtT']) + p['b_dt']
    delta = jax.nn.softplus(dt)
    A_T = p['A_T']
    state = jnp.zeros((Bsz, d_state, d_inner), x.dtype)
    ys = []
    for l in range(L):
        dA = jnp.exp(delta[:, l, None, :] * A_T[None, :, :])
        dBu = (delta[:, l, :] * u[:, l, :])[:, None, :] * Bm[:, l, :, None]
        state = dA * state + dBu
        ys.append(jnp.sum(state * Cm[:, l, :, None], axis=1))
    y = jnp.stack(ys, axis=1)
    y = y + u * p['Dp']
    y = y * (z * jax.nn.sigmoid(z))
    return jnp.einsum('ble,ed->bld', y, p['w_outT']), resid


def bimamba_ref(x, fwd_params, bwd_params, eps):
    xf, rf = x, jnp.zeros_like(x)
    for p in fwd_params:
        xf, rf = _mamba_block_ref(xf, rf, p, eps)
    yf = xf + rf
    xb, rb = jnp.flip(x, axis=1), jnp.zeros_like(x)
    for p in bwd_params:
        xb, rb = _mamba_block_ref(xb, rb, p, eps)
    yb = jnp.flip(xb + rb, axis=1)
    return jnp.concatenate([yf, yb], axis=-1)


# --------------------------------------------------------------------------- #
if __name__ == "__main__":
    cfg = {'model_config': {'hid_feature': 32, 'd_state': 16, 'd_conv': 4,
                            'expand': 2, 'norm_epsilon': 1e-5}}
    n_layer = 1
    B, L = 2, 8
    mc = cfg['model_config']
    D = mc['hid_feature']
    eps = mc['norm_epsilon']

    key = jax.random.PRNGKey(0)
    kx, kparams = jax.random.split(key)
    x = jax.random.normal(kx, (B, L, D), jnp.float32)

    fwd_params = [init_block_params(jax.random.fold_in(kparams, i),
                                    D, mc['d_state'], mc['d_conv'], mc['expand'])
                  for i in range(n_layer)]
    bwd_params = [init_block_params(jax.random.fold_in(kparams, 100 + i),
                                    D, mc['d_state'], mc['d_conv'], mc['expand'])
                  for i in range(n_layer)]

    out = bimamba_forward(x, fwd_params, bwd_params, eps)
    out = jax.block_until_ready(out)
    assert out.shape == (B, L, 2 * D), out.shape

    ref = bimamba_ref(x, fwd_params, bwd_params, eps)
    # kernel uses bf16 MXU matmuls (f32 accumulation); reference is f32.
    np.testing.assert_allclose(np.asarray(out), np.asarray(ref), rtol=5e-2, atol=2e-2)

    print("KERNEL_OK")
</pallas_src>

<mosaic_0001>
module attributes {stable_mosaic.version = 11 : i64} {
  func.func @_mamba_block_kernel(%arg0: i32, %arg1: memref<2x8x32xf32, #tpu.memory_space<vmem>>, %arg2: memref<2x8x32xf32, #tpu.memory_space<vmem>>, %arg3: memref<1x32xf32, #tpu.memory_space<vmem>>, %arg4: memref<32x128xbf16, #tpu.memory_space<vmem>>, %arg5: memref<4x64xf32, #tpu.memory_space<vmem>>, %arg6: memref<1x64xf32, #tpu.memory_space<vmem>>, %arg7: memref<64x34xbf16, #tpu.memory_space<vmem>>, %arg8: memref<2x64xbf16, #tpu.memory_space<vmem>>, %arg9: memref<1x64xf32, #tpu.memory_space<vmem>>, %arg10: memref<16x64xf32, #tpu.memory_space<vmem>>, %arg11: memref<1x64xf32, #tpu.memory_space<vmem>>, %arg12: memref<64x32xbf16, #tpu.memory_space<vmem>>, %arg13: memref<2x8x32xf32, #tpu.memory_space<vmem>>, %arg14: memref<2x8x32xf32, #tpu.memory_space<vmem>>, %arg15: memref<16x16x64xf32, #tpu.memory_space<vmem>>, %arg16: memref<16x16x64xf32, #tpu.memory_space<vmem>>) attributes {dimension_semantics = [#tpu.dimension_semantics<parallel>], iteration_bounds = array<i64: 1>, scalar_prefetch = 0 : i64, scratch_operands = 2 : i64, tpu.core_type = #tpu.core_type<tc>, window_params = [{transform_indices = @transform_0, window_bounds = array<i64: 2, 8, 32>}, {transform_indices = @transform_1, window_bounds = array<i64: 2, 8, 32>}, {pipeline_mode = #tpu.pipeline_mode<synchronous>, transform_indices = @transform_2, window_bounds = array<i64: 1, 32>}, {pipeline_mode = #tpu.pipeline_mode<synchronous>, transform_indices = @transform_3, window_bounds = array<i64: 32, 128>}, {pipeline_mode = #tpu.pipeline_mode<synchronous>, transform_indices = @transform_4, window_bounds = array<i64: 4, 64>}, {pipeline_mode = #tpu.pipeline_mode<synchronous>, transform_indices = @transform_5, window_bounds = array<i64: 1, 64>}, {pipeline_mode = #tpu.pipeline_mode<synchronous>, transform_indices = @transform_6, window_bounds = array<i64: 64, 34>}, {pipeline_mode = #tpu.pipeline_mode<synchronous>, transform_indices = @transform_7, window_bounds = array<i64: 2, 64>}, {pipeline_mode = #tpu.pipeline_mode<synchronous>, transform_indices = @transform_8, window_bounds = array<i64: 1, 64>}, {pipeline_mode = #tpu.pipeline_mode<synchronous>, transform_indices = @transform_9, window_bounds = array<i64: 16, 64>}, {pipeline_mode = #tpu.pipeline_mode<synchronous>, transform_indices = @transform_10, window_bounds = array<i64: 1, 64>}, {pipeline_mode = #tpu.pipeline_mode<synchronous>, transform_indices = @transform_11, window_bounds = array<i64: 64, 32>}, {transform_indices = @transform_12, window_bounds = array<i64: 2, 8, 32>}, {transform_indices = @transform_13, window_bounds = array<i64: 2, 8, 32>}]} {
    %c0 = arith.constant 0 : index
    %c0_0 = arith.constant 0 : index
    %c0_1 = arith.constant 0 : index
    %0 = vector.load %arg1[%c0, %c0_0, %c0_1] : memref<2x8x32xf32, #tpu.memory_space<vmem>>, vector<2x8x32xf32>
    %1 = vector.shape_cast %0 : vector<2x8x32xf32> to vector<16x32xf32>
    %c0_2 = arith.constant 0 : index
    %c0_3 = arith.constant 0 : index
    %c0_4 = arith.constant 0 : index
    %2 = vector.load %arg2[%c0_2, %c0_3, %c0_4] : memref<2x8x32xf32, #tpu.memory_space<vmem>>, vector<2x8x32xf32>
    %3 = vector.shape_cast %2 : vector<2x8x32xf32> to vector<16x32xf32>
    %4 = arith.addf %1, %3 : vector<16x32xf32>
    %5 = arith.mulf %4, %4 : vector<16x32xf32>
    %cst = arith.constant dense<0.000000e+00> : vector<16xf32>
    %6 = vector.multi_reduction <add>, %5, %cst [1] : vector<16x32xf32> to vector<16xf32>
    %7 = vector.shape_cast %6 : vector<16xf32> to vector<16x1xf32>
    %cst_5 = arith.constant 3.200000e+01 : f32
    %8 = vector.broadcast %cst_5 : f32 to vector<16x1xf32>
    %9 = arith.divf %7, %8 : vector<16x1xf32>
    %cst_6 = arith.constant 9.99999974E-6 : f32
    %10 = vector.broadcast %cst_6 : f32 to vector<16x1xf32>
    %11 = arith.addf %9, %10 : vector<16x1xf32>
    %12 = math.rsqrt %11 : vector<16x1xf32>
    %13 = vector.broadcast %12 : vector<16x1xf32> to vector<16x32xf32>
    %14 = arith.mulf %4, %13 : vector<16x32xf32>
    %c0_7 = arith.constant 0 : index
    %c0_8 = arith.constant 0 : index
    %15 = vector.load %arg3[%c0_7, %c0_8] : memref<1x32xf32, #tpu.memory_space<vmem>>, vector<1x32xf32>
    %16 = vector.broadcast %15 : vector<1x32xf32> to vector<16x32xf32>
    %17 = arith.mulf %14, %16 : vector<16x32xf32>
    %18 = arith.truncf %17 : vector<16x32xf32> to vector<16x32xbf16>
    %c0_9 = arith.constant 0 : index
    %c0_10 = arith.constant 0 : index
    %19 = vector.load %arg4[%c0_9, %c0_10] : memref<32x128xbf16, #tpu.memory_space<vmem>>, vector<32x128xbf16>
    %cst_11 = arith.constant dense<0.000000e+00> : vector<16x128xf32>
    %20 = tpu.matmul %18, %19, %cst_11 {dimension_numbers = #tpu.dot_dimension_numbers<[1], [0], [0], [1], [0, 0, 1, 1], [], []>} : vector<16x32xbf16>, vector<32x128xbf16>, vector<16x128xf32> -> vector<16x128xf32>
    %21 = vector.extract_strided_slice %20 {offsets = [0, 0], sizes = [16, 64], strides = [1, 1]} : vector<16x128xf32> to vector<16x64xf32>
    %22 = vector.extract_strided_slice %20 {offsets = [0, 64], sizes = [16, 64], strides = [1, 1]} : vector<16x128xf32> to vector<16x64xf32>
    %c0_12 = arith.constant 0 : index
    %c0_13 = arith.constant 0 : index
    %23 = vector.load %arg5[%c0_12, %c0_13] : memref<4x64xf32, #tpu.memory_space<vmem>>, vector<4x64xf32>
    %24 = tpu.iota {dimensions = array<i32: 0>} : vector<16x1xi32>
    %c8_i32 = arith.constant 8 : i32
    %c0_i32 = arith.constant 0 : i32
    %25 = arith.cmpi eq, %c8_i32, %c0_i32 : i32
    %c1_i32 = arith.constant 1 : i32
    %26 = arith.select %25, %c1_i32, %c8_i32 : i32
    %27 = vector.broadcast %26 : i32 to vector<16x1xi32>
    %28 = arith.remsi %24, %27 : vector<16x1xi32>
    %c0_i32_14 = arith.constant 0 : i32
    %29 = vector.broadcast %c0_i32_14 : i32 to vector<16x1xi32>
    %30 = arith.cmpi ne, %28, %29 : vector<16x1xi32>
    %c0_i32_15 = arith.constant 0 : i32
    %31 = vector.broadcast %c0_i32_15 : i32 to vector<16x1xi32>
    %32 = arith.cmpi slt, %28, %31 : vector<16x1xi32>
    %c0_i32_16 = arith.constant 0 : i32
    %33 = arith.cmpi slt, %26, %c0_i32_16 : i32
    %34 = vector.broadcast %33 : i1 to vector<16x1xi1>
    %35 = vector.broadcast %34 : vector<16x1xi1> to vector<16x1xi1>
    %36 = arith.xori %32, %35 : vector<16x1xi1>
    %37 = arith.andi %36, %30 : vector<16x1xi1>
    %38 = vector.broadcast %26 : i32 to vector<16x1xi32>
    %39 = arith.addi %28, %38 : vector<16x1xi32>
    %40 = arith.select %37, %39, %28 : vector<16x1xi1>, vector<16x1xi32>
    %cst_17 = arith.constant 0.000000e+00 : f32
    %41 = vector.broadcast %cst_17 : f32 to vector<16x64xf32>
    %c0_18 = arith.constant 0 : index
    %c0_19 = arith.constant 0 : index
    %42 = vector.load %arg6[%c0_18, %c0_19] : memref<1x64xf32, #tpu.memory_space<vmem>>, vector<1x64xf32>
    %43 = vector.broadcast %42 : vector<1x64xf32> to vector<16x64xf32>
    %44 = arith.addf %41, %43 : vector<16x64xf32>
    %45 = vector.extract_strided_slice %23 {offsets = [3, 0], sizes = [1, 64], strides = [1, 1]} : vector<4x64xf32> to vector<1x64xf32>
    %46 = vector.broadcast %45 : vector<1x64xf32> to vector<16x64xf32>
    %47 = arith.mulf %21, %46 : vector<16x64xf32>
    %48 = arith.addf %44, %47 : vector<16x64xf32>
    %49 = vector.extract_strided_slice %23 {offsets = [2, 0], sizes = [1, 64], strides = [1, 1]} : vector<4x64xf32> to vector<1x64xf32>
    %c1_i32_20 = arith.constant 1 : i32
    %50 = tpu.dynamic_rotate %21 by %c1_i32_20 dim 0 : vector<16x64xf32>, i32 -> vector<16x64xf32>
    %c1_i32_21 = arith.constant 1 : i32
    %51 = vector.broadcast %c1_i32_21 : i32 to vector<16x1xi32>
    %52 = arith.cmpi sge, %40, %51 : vector<16x1xi32>
    %cst_22 = arith.constant 0.000000e+00 : f32
    %53 = vector.shape_cast %52 : vector<16x1xi1> to vector<16x1xi1>
    %54 = vector.broadcast %53 : vector<16x1xi1> to vector<16x64xi1>
    %55 = vector.broadcast %cst_22 : f32 to vector<16x64xf32>
    %56 = arith.select %54, %50, %55 : vector<16x64xi1>, vector<16x64xf32>
    %57 = vector.broadcast %49 : vector<1x64xf32> to vector<16x64xf32>
    %58 = arith.mulf %56, %57 : vector<16x64xf32>
    %59 = arith.addf %48, %58 : vector<16x64xf32>
    %60 = vector.extract_strided_slice %23 {offsets = [1, 0], sizes = [1, 64], strides = [1, 1]} : vector<4x64xf32> to vector<1x64xf32>
    %c2_i32 = arith.constant 2 : i32
    %61 = tpu.dynamic_rotate %21 by %c2_i32 dim 0 : vector<16x64xf32>, i32 -> vector<16x64xf32>
    %c2_i32_23 = arith.constant 2 : i32
    %62 = vector.broadcast %c2_i32_23 : i32 to vector<16x1xi32>
    %63 = arith.cmpi sge, %40, %62 : vector<16x1xi32>
    %cst_24 = arith.constant 0.000000e+00 : f32
    %64 = vector.shape_cast %63 : vector<16x1xi1> to vector<16x1xi1>
    %65 = vector.broadcast %64 : vector<16x1xi1> to vector<16x64xi1>
    %66 = vector.broadcast %cst_24 : f32 to vector<16x64xf32>
    %67 = arith.select %65, %61, %66 : vector<16x64xi1>, vector<16x64xf32>
    %68 = vector.broadcast %60 : vector<1x64xf32> to vector<16x64xf32>
    %69 = arith.mulf %67, %68 : vector<16x64xf32>
    %70 = arith.addf %59, %69 : vector<16x64xf32>
    %71 = vector.extract_strided_slice %23 {offsets = [0, 0], sizes = [1, 64], strides = [1, 1]} : vector<4x64xf32> to vector<1x64xf32>
    %c3_i32 = arith.constant 3 : i32
    %72 = tpu.dynamic_rotate %21 by %c3_i32 dim 0 : vector<16x64xf32>, i32 -> vector<16x64xf32>
    %c3_i32_25 = arith.constant 3 : i32
    %73 = vector.broadcast %c3_i32_25 : i32 to vector<16x1xi32>
    %74 = arith.cmpi sge, %40, %73 : vector<16x1xi32>
    %cst_26 = arith.constant 0.000000e+00 : f32
    %75 = vector.shape_cast %74 : vector<16x1xi1> to vector<16x1xi1>
    %76 = vector.broadcast %75 : vector<16x1xi1> to vector<16x64xi1>
    %77 = vector.broadcast %cst_26 : f32 to vector<16x64xf32>
    %78 = arith.select %76, %72, %77 : vector<16x64xi1>, vector<16x64xf32>
    %79 = vector.broadcast %71 : vector<1x64xf32> to vector<16x64xf32>
    %80 = arith.mulf %78, %79 : vector<16x64xf32>
    %81 = arith.addf %70, %80 : vector<16x64xf32>
    %82 = arith.negf %81 : vector<16x64xf32>
    %83 = math.exp %82 : vector<16x64xf32>
    %cst_27 = arith.constant 1.000000e+00 : f32
    %84 = vector.broadcast %cst_27 : f32 to vector<16x64xf32>
    %85 = arith.addf %84, %83 : vector<16x64xf32>
    %86 = arith.divf %84, %85 : vector<16x64xf32>
    %87 = arith.mulf %81, %86 : vector<16x64xf32>
    %88 = arith.truncf %87 : vector<16x64xf32> to vector<16x64xbf16>
    %c0_28 = arith.constant 0 : index
    %c0_29 = arith.constant 0 : index
    %89 = vector.load %arg7[%c0_28, %c0_29] : memref<64x34xbf16, #tpu.memory_space<vmem>>, vector<64x34xbf16>
    %cst_30 = arith.constant dense<0.000000e+00> : vector<16x34xf32>
    %90 = tpu.matmul %88, %89, %cst_30 {dimension_numbers = #tpu.dot_dimension_numbers<[1], [0], [0], [1], [0, 0, 1, 1], [], []>} : vector<16x64xbf16>, vector<64x34xbf16>, vector<16x34xf32> -> vector<16x34xf32>
    %91 = vector.extract_strided_slice %90 {offsets = [0, 0], sizes = [16, 16], strides = [1, 1]} : vector<16x34xf32> to vector<16x16xf32>
    %92 = vector.extract_strided_slice %90 {offsets = [0, 16], sizes = [16, 16], strides = [1, 1]} : vector<16x34xf32> to vector<16x16xf32>
    %93 = vector.extract_strided_slice %90 {offsets = [0, 32], sizes = [16, 2], strides = [1, 1]} : vector<16x34xf32> to vector<16x2xf32>
    %94 = arith.truncf %93 : vector<16x2xf32> to vector<16x2xbf16>
    %c0_31 = arith.constant 0 : index
    %c0_32 = arith.constant 0 : index
    %95 = vector.load %arg8[%c0_31, %c0_32] : memref<2x64xbf16, #tpu.memory_space<vmem>>, vector<2x64xbf16>
    %cst_33 = arith.constant dense<0.000000e+00> : vector<16x64xf32>
    %96 = tpu.matmul %94, %95, %cst_33 {dimension_numbers = #tpu.dot_dimension_numbers<[1], [0], [0], [1], [0, 0, 1, 1], [], []>} : vector<16x2xbf16>, vector<2x64xbf16>, vector<16x64xf32> -> vector<16x64xf32>
    %c0_34 = arith.constant 0 : index
    %c0_35 = arith.constant 0 : index
    %97 = vector.load %arg9[%c0_34, %c0_35] : memref<1x64xf32, #tpu.memory_space<vmem>>, vector<1x64xf32>
    %98 = vector.broadcast %97 : vector<1x64xf32> to vector<16x64xf32>
    %99 = arith.addf %96, %98 : vector<16x64xf32>
    %cst_36 = arith.constant 0.000000e+00 : f32
    %100 = vector.broadcast %cst_36 : f32 to vector<16x64xf32>
    %101 = arith.maximumf %99, %100 : vector<16x64xf32>
    %102 = vector.broadcast %cst_36 : f32 to vector<16x64xf32>
    %103 = arith.subf %99, %102 : vector<16x64xf32>
    %104 = arith.cmpf one, %103, %103 : vector<16x64xf32>
    %105 = vector.broadcast %cst_36 : f32 to vector<16x64xf32>
    %106 = arith.addf %99, %105 : vector<16x64xf32>
    %107 = math.absf %103 : vector<16x64xf32>
    %cst_37 = arith.constant 0.000000e+00 : f32
    %108 = vector.broadcast %cst_37 : f32 to vector<16x64xf32>
    %109 = arith.subf %108, %107 : vector<16x64xf32>
    %110 = math.exp %109 : vector<16x64xf32>
    %111 = math.log1p %110 : vector<16x64xf32>
    %112 = arith.addf %101, %111 : vector<16x64xf32>
    %113 = arith.select %104, %106, %112 : vector<16x64xi1>, vector<16x64xf32>
    %114 = vector.shape_cast %113 : vector<16x64xf32> to vector<16x1x64xf32>
    %c0_38 = arith.constant 0 : index
    %c0_39 = arith.constant 0 : index
    %115 = vector.load %arg10[%c0_38, %c0_39] : memref<16x64xf32, #tpu.memory_space<vmem>>, vector<16x64xf32>
    %116 = vector.shape_cast %115 : vector<16x64xf32> to vector<1x16x64xf32>
    %117 = vector.broadcast %114 : vector<16x1x64xf32> to vector<16x16x64xf32>
    %118 = vector.broadcast %116 : vector<1x16x64xf32> to vector<16x16x64xf32>
    %119 = arith.mulf %117, %118 : vector<16x16x64xf32>
    %120 = math.exp %119 : vector<16x16x64xf32>
    %c0_40 = arith.constant 0 : index
    %c0_41 = arith.constant 0 : index
    %c0_42 = arith.constant 0 : index
    %121 = vector.load %arg15[%c0_40, %c0_41, %c0_42] : memref<16x16x64xf32, #tpu.memory_space<vmem>>, vector<16x16x64xf32>
    tpu.vector_store %arg15[%c0_40, %c0_41, %c0_42], %120 {strides = array<i32>} : memref<16x16x64xf32, #tpu.memory_space<vmem>>, vector<16x16x64xf32>,
    %122 = arith.mulf %113, %87 : vector<16x64xf32>
    %123 = vector.shape_cast %122 : vector<16x64xf32> to vector<16x1x64xf32>
    %124 = vector.shape_cast %91 : vector<16x16xf32> to vector<16x16x1xf32>
    %125 = vector.broadcast %123 : vector<16x1x64xf32> to vector<16x16x64xf32>
    %126 = vector.broadcast %124 : vector<16x16x1xf32> to vector<16x16x64xf32>
    %127 = arith.mulf %125, %126 : vector<16x16x64xf32>
    %c0_43 = arith.constant 0 : index
    %c0_44 = arith.constant 0 : index
    %c0_45 = arith.constant 0 : index
    %128 = vector.load %arg16[%c0_43, %c0_44, %c0_45] : memref<16x16x64xf32, #tpu.memory_space<vmem>>, vector<16x16x64xf32>
    tpu.vector_store %arg16[%c0_43, %c0_44, %c0_45], %127 {strides = array<i32>} : memref<16x16x64xf32, #tpu.memory_space<vmem>>, vector<16x16x64xf32>,
    %cst_46 = arith.constant 0.000000e+00 : f32
    %129 = vector.broadcast %cst_46 : f32 to vector<16x64xf32>
    %c0_i32_47 = arith.constant 0 : i32
    %c0_i32_48 = arith.constant 0 : i32
    %130 = arith.addi %c0_i32_48, %c0_i32_47 : i32
    %131 = arith.index_cast %130 : i32 to index
    %c0_49 = arith.constant 0 : index
    %c0_50 = arith.constant 0 : index
    %132 = vector.load %arg15[%131, %c0_49, %c0_50] : memref<16x16x64xf32, #tpu.memory_space<vmem>>, vector<1x16x64xf32>
    %133 = vector.shape_cast %132 : vector<1x16x64xf32> to vector<16x64xf32>
    %134 = arith.mulf %133, %129 : vector<16x64xf32>
    %135 = arith.index_cast %130 : i32 to index
    %c0_51 = arith.constant 0 : index
    %c0_52 = arith.constant 0 : index
    %136 = vector.load %arg16[%135, %c0_51, %c0_52] : memref<16x16x64xf32, #tpu.memory_space<vmem>>, vector<1x16x64xf32>
    %137 = vector.shape_cast %136 : vector<1x16x64xf32> to vector<16x64xf32>
    %138 = arith.addf %134, %137 : vector<16x64xf32>
    %139 = arith.index_cast %130 : i32 to index
    %c0_53 = arith.constant 0 : index
    %c0_54 = arith.constant 0 : index
    %140 = vector.load %arg16[%139, %c0_53, %c0_54] : memref<16x16x64xf32, #tpu.memory_space<vmem>>, vector<1x16x64xf32>
    %141 = vector.shape_cast %140 : vector<1x16x64xf32> to vector<16x64xf32>
    %142 = vector.shape_cast %138 : vector<16x64xf32> to vector<1x16x64xf32>
    tpu.vector_store %arg16[%139, %c0_53, %c0_54], %142 {strides = array<i32>} : memref<16x16x64xf32, #tpu.memory_space<vmem>>, vector<1x16x64xf32>,
    %c1_i32_55 = arith.constant 1 : i32
    %c0_i32_56 = arith.constant 0 : i32
    %143 = arith.addi %c0_i32_56, %c1_i32_55 : i32
    %144 = arith.index_cast %143 : i32 to index
    %c0_57 = arith.constant 0 : index
    %c0_58 = arith.constant 0 : index
    %145 = vector.load %arg15[%144, %c0_57, %c0_58] : memref<16x16x64xf32, #tpu.memory_space<vmem>>, vector<1x16x64xf32>
    %146 = vector.shape_cast %145 : vector<1x16x64xf32> to vector<16x64xf32>
    %147 = arith.mulf %146, %138 : vector<16x64xf32>
    %148 = arith.index_cast %143 : i32 to index
    %c0_59 = arith.constant 0 : index
    %c0_60 = arith.constant 0 : index
    %149 = vector.load %arg16[%148, %c0_59, %c0_60] : memref<16x16x64xf32, #tpu.memory_space<vmem>>, vector<1x16x64xf32>
    %150 = vector.shape_cast %149 : vector<1x16x64xf32> to vector<16x64xf32>
    %151 = arith.addf %147, %150 : vector<16x64xf32>
    %152 = arith.index_cast %143 : i32 to index
    %c0_61 = arith.constant 0 : index
    %c0_62 = arith.constant 0 : index
    %153 = vector.load %arg16[%152, %c0_61, %c0_62] : memref<16x16x64xf32, #tpu.memory_space<vmem>>, vector<1x16x64xf32>
    %154 = vector.shape_cast %153 : vector<1x16x64xf32> to vector<16x64xf32>
    %155 = vector.shape_cast %151 : vector<16x64xf32> to vector<1x16x64xf32>
    tpu.vector_store %arg16[%152, %c0_61, %c0_62], %155 {strides = array<i32>} : memref<16x16x64xf32, #tpu.memory_space<vmem>>, vector<1x16x64xf32>,
    %c2_i32_63 = arith.constant 2 : i32
    %c0_i32_64 = arith.constant 0 : i32
    %156 = arith.addi %c0_i32_64, %c2_i32_63 : i32
    %157 = arith.index_cast %156 : i32 to index
    %c0_65 = arith.constant 0 : index
    %c0_66 = arith.constant 0 : index
    %158 = vector.load %arg15[%157, %c0_65, %c0_66] : memref<16x16x64xf32, #tpu.memory_space<vmem>>, vector<1x16x64xf32>
    %159 = vector.shape_cast %158 : vector<1x16x64xf32> to vector<16x64xf32>
    %160 = arith.mulf %159, %151 : vector<16x64xf32>
    %161 = arith.index_cast %156 : i32 to index
    %c0_67 = arith.constant 0 : index
    %c0_68 = arith.constant 0 : index
    %162 = vector.load %arg16[%161, %c0_67, %c0_68] : memref<16x16x64xf32, #tpu.memory_space<vmem>>, vector<1x16x64xf32>
    %163 = vector.shape_cast %162 : vector<1x16x64xf32> to vector<16x64xf32>
    %164 = arith.addf %160, %163 : vector<16x64xf32>
    %165 = arith.index_cast %156 : i32 to index
    %c0_69 = arith.constant 0 : index
    %c0_70 = arith.constant 0 : index
    %166 = vector.load %arg16[%165, %c0_69, %c0_70] : memref<16x16x64xf32, #tpu.memory_space<vmem>>, vector<1x16x64xf32>
    %167 = vector.shape_cast %166 : vector<1x16x64xf32> to vector<16x64xf32>
    %168 = vector.shape_cast %164 : vector<16x64xf32> to vector<1x16x64xf32>
    tpu.vector_store %arg16[%165, %c0_69, %c0_70], %168 {strides = array<i32>} : memref<16x16x64xf32, #tpu.memory_space<vmem>>, vector<1x16x64xf32>,
    %c3_i32_71 = arith.constant 3 : i32
    %c0_i32_72 = arith.constant 0 : i32
    %169 = arith.addi %c0_i32_72, %c3_i32_71 : i32
    %170 = arith.index_cast %169 : i32 to index
    %c0_73 = arith.constant 0 : index
    %c0_74 = arith.constant 0 : index
    %171 = vector.load %arg15[%170, %c0_73, %c0_74] : memref<16x16x64xf32, #tpu.memory_space<vmem>>, vector<1x16x64xf32>
    %172 = vector.shape_cast %171 : vector<1x16x64xf32> to vector<16x64xf32>
    %173 = arith.mulf %172, %164 : vector<16x64xf32>
    %174 = arith.index_cast %169 : i32 to index
    %c0_75 = arith.constant 0 : index
    %c0_76 = arith.constant 0 : index
    %175 = vector.load %arg16[%174, %c0_75, %c0_76] : memref<16x16x64xf32, #tpu.memory_space<vmem>>, vector<1x16x64xf32>
    %176 = vector.shape_cast %175 : vector<1x16x64xf32> to vector<16x64xf32>
    %177 = arith.addf %173, %176 : vector<16x64xf32>
    %178 = arith.index_cast %169 : i32 to index
    %c0_77 = arith.constant 0 : index
    %c0_78 = arith.constant 0 : index
    %179 = vector.load %arg16[%178, %c0_77, %c0_78] : memref<16x16x64xf32, #tpu.memory_space<vmem>>, vector<1x16x64xf32>
    %180 = vector.shape_cast %179 : vector<1x16x64xf32> to vector<16x64xf32>
    %181 = vector.shape_cast %177 : vector<16x64xf32> to vector<1x16x64xf32>
    tpu.vector_store %arg16[%178, %c0_77, %c0_78], %181 {strides = array<i32>} : memref<16x16x64xf32, #tpu.memory_space<vmem>>, vector<1x16x64xf32>,
    %c4_i32 = arith.constant 4 : i32
    %c0_i32_79 = arith.constant 0 : i32
    %182 = arith.addi %c0_i32_79, %c4_i32 : i32
    %183 = arith.index_cast %182 : i32 to index
    %c0_80 = arith.constant 0 : index
    %c0_81 = arith.constant 0 : index
    %184 = vector.load %arg15[%183, %c0_80, %c0_81] : memref<16x16x64xf32, #tpu.memory_space<vmem>>, vector<1x16x64xf32>
    %185 = vector.shape_cast %184 : vector<1x16x64xf32> to vector<16x64xf32>
    %186 = arith.mulf %185, %177 : vector<16x64xf32>
    %187 = arith.index_cast %182 : i32 to index
    %c0_82 = arith.constant 0 : index
    %c0_83 = arith.constant 0 : index
    %188 = vector.load %arg16[%187, %c0_82, %c0_83] : memref<16x16x64xf32, #tpu.memory_space<vmem>>, vector<1x16x64xf32>
    %189 = vector.shape_cast %188 : vector<1x16x64xf32> to vector<16x64xf32>
    %190 = arith.addf %186, %189 : vector<16x64xf32>
    %191 = arith.index_cast %182 : i32 to index
    %c0_84 = arith.constant 0 : index
    %c0_85 = arith.constant 0 : index
    %192 = vector.load %arg16[%191, %c0_84, %c0_85] : memref<16x16x64xf32, #tpu.memory_space<vmem>>, vector<1x16x64xf32>
    %193 = vector.shape_cast %192 : vector<1x16x64xf32> to vector<16x64xf32>
    %194 = vector.shape_cast %190 : vector<16x64xf32> to vector<1x16x64xf32>
    tpu.vector_store %arg16[%191, %c0_84, %c0_85], %194 {strides = array<i32>} : memref<16x16x64xf32, #tpu.memory_space<vmem>>, vector<1x16x64xf32>,
    %c5_i32 = arith.constant 5 : i32
    %c0_i32_86 = arith.constant 0 : i32
    %195 = arith.addi %c0_i32_86, %c5_i32 : i32
    %196 = arith.index_cast %195 : i32 to index
    %c0_87 = arith.constant 0 : index
    %c0_88 = arith.constant 0 : index
    %197 = vector.load %arg15[%196, %c0_87, %c0_88] : memref<16x16x64xf32, #tpu.memory_space<vmem>>, vector<1x16x64xf32>
    %198 = vector.shape_cast %197 : vector<1x16x64xf32> to vector<16x64xf32>
    %199 = arith.mulf %198, %190 : vector<16x64xf32>
    %200 = arith.index_cast %195 : i32 to index
    %c0_89 = arith.constant 0 : index
    %c0_90 = arith.constant 0 : index
    %201 = vector.load %arg16[%200, %c0_89, %c0_90] : memref<16x16x64xf32, #tpu.memory_space<vmem>>, vector<1x16x64xf32>
    %202 = vector.shape_cast %201 : vector<1x16x64xf32> to vector<16x64xf32>
    %203 = arith.addf %199, %202 : vector<16x64xf32>
    %204 = arith.index_cast %195 : i32 to index
    %c0_91 = arith.constant 0 : index
    %c0_92 = arith.constant 0 : index
    %205 = vector.load %arg16[%204, %c0_91, %c0_92] : memref<16x16x64xf32, #tpu.memory_space<vmem>>, vector<1x16x64xf32>
    %206 = vector.shape_cast %205 : vector<1x16x64xf32> to vector<16x64xf32>
    %207 = vector.shape_cast %203 : vector<16x64xf32> to vector<1x16x64xf32>
    tpu.vector_store %arg16[%204, %c0_91, %c0_92], %207 {strides = array<i32>} : memref<16x16x64xf32, #tpu.memory_space<vmem>>, vector<1x16x64xf32>,
    %c6_i32 = arith.constant 6 : i32
    %c0_i32_93 = arith.constant 0 : i32
    %208 = arith.addi %c0_i32_93, %c6_i32 : i32
    %209 = arith.index_cast %208 : i32 to index
    %c0_94 = arith.constant 0 : index
    %c0_95 = arith.constant 0 : index
    %210 = vector.load %arg15[%209, %c0_94, %c0_95] : memref<16x16x64xf32, #tpu.memory_space<vmem>>, vector<1x16x64xf32>
    %211 = vector.shape_cast %210 : vector<1x16x64xf32> to vector<16x64xf32>
    %212 = arith.mulf %211, %203 : vector<16x64xf32>
    %213 = arith.index_cast %208 : i32 to index
    %c0_96 = arith.constant 0 : index
    %c0_97 = arith.constant 0 : index
    %214 = vector.load %arg16[%213, %c0_96, %c0_97] : memref<16x16x64xf32, #tpu.memory_space<vmem>>, vector<1x16x64xf32>
    %215 = vector.shape_cast %214 : vector<1x16x64xf32> to vector<16x64xf32>
    %216 = arith.addf %212, %215 : vector<16x64xf32>
    %217 = arith.index_cast %208 : i32 to index
    %c0_98 = arith.constant 0 : index
    %c0_99 = arith.constant 0 : index
    %218 = vector.load %arg16[%217, %c0_98, %c0_99] : memref<16x16x64xf32, #tpu.memory_space<vmem>>, vector<1x16x64xf32>
    %219 = vector.shape_cast %218 : vector<1x16x64xf32> to vector<16x64xf32>
    %220 = vector.shape_cast %216 : vector<16x64xf32> to vector<1x16x64xf32>
    tpu.vector_store %arg16[%217, %c0_98, %c0_99], %220 {strides = array<i32>} : memref<16x16x64xf32, #tpu.memory_space<vmem>>, vector<1x16x64xf32>,
    %c7_i32 = arith.constant 7 : i32
    %c0_i32_100 = arith.constant 0 : i32
    %221 = arith.addi %c0_i32_100, %c7_i32 : i32
    %222 = arith.index_cast %221 : i32 to index
    %c0_101 = arith.constant 0 : index
    %c0_102 = arith.constant 0 : index
    %223 = vector.load %arg15[%222, %c0_101, %c0_102] : memref<16x16x64xf32, #tpu.memory_space<vmem>>, vector<1x16x64xf32>
    %224 = vector.shape_cast %223 : vector<1x16x64xf32> to vector<16x64xf32>
    %225 = arith.mulf %224, %216 : vector<16x64xf32>
    %226 = arith.index_cast %221 : i32 to index
    %c0_103 = arith.constant 0 : index
    %c0_104 = arith.constant 0 : index
    %227 = vector.load %arg16[%226, %c0_103, %c0_104] : memref<16x16x64xf32, #tpu.memory_space<vmem>>, vector<1x16x64xf32>
    %228 = vector.shape_cast %227 : vector<1x16x64xf32> to vector<16x64xf32>
    %229 = arith.addf %225, %228 : vector<16x64xf32>
    %230 = arith.index_cast %221 : i32 to index
    %c0_105 = arith.constant 0 : index
    %c0_106 = arith.constant 0 : index
    %231 = vector.load %arg16[%230, %c0_105, %c0_106] : memref<16x16x64xf32, #tpu.memory_space<vmem>>, vector<1x16x64xf32>
    %232 = vector.shape_cast %231 : vector<1x16x64xf32> to vector<16x64xf32>
    %233 = vector.shape_cast %229 : vector<16x64xf32> to vector<1x16x64xf32>
    tpu.vector_store %arg16[%230, %c0_105, %c0_106], %233 {strides = array<i32>} : memref<16x16x64xf32, #tpu.memory_space<vmem>>, vector<1x16x64xf32>,
    %c8_i32_107 = arith.constant 8 : i32
    %cst_108 = arith.constant 0.000000e+00 : f32
    %234 = vector.broadcast %cst_108 : f32 to vector<16x64xf32>
    %c0_i32_109 = arith.constant 0 : i32
    %c8_i32_110 = arith.constant 8 : i32
    %235 = arith.addi %c8_i32_110, %c0_i32_109 : i32
    %236 = arith.index_cast %235 : i32 to index
    %c0_111 = arith.constant 0 : index
    %c0_112 = arith.constant 0 : index
    %237 = vector.load %arg15[%236, %c0_111, %c0_112] : memref<16x16x64xf32, #tpu.memory_space<vmem>>, vector<1x16x64xf32>
    %238 = vector.shape_cast %237 : vector<1x16x64xf32> to vector<16x64xf32>
    %239 = arith.mulf %238, %234 : vector<16x64xf32>
    %240 = arith.index_cast %235 : i32 to index
    %c0_113 = arith.constant 0 : index
    %c0_114 = arith.constant 0 : index
    %241 = vector.load %arg16[%240, %c0_113, %c0_114] : memref<16x16x64xf32, #tpu.memory_space<vmem>>, vector<1x16x64xf32>
    %242 = vector.shape_cast %241 : vector<1x16x64xf32> to vector<16x64xf32>
    %243 = arith.addf %239, %242 : vector<16x64xf32>
    %244 = arith.index_cast %235 : i32 to index
    %c0_115 = arith.constant 0 : index
    %c0_116 = arith.constant 0 : index
    %245 = vector.load %arg16[%244, %c0_115, %c0_116] : memref<16x16x64xf32, #tpu.memory_space<vmem>>, vector<1x16x64xf32>
    %246 = vector.shape_cast %245 : vector<1x16x64xf32> to vector<16x64xf32>
    %247 = vector.shape_cast %243 : vector<16x64xf32> to vector<1x16x64xf32>
    tpu.vector_store %arg16[%244, %c0_115, %c0_116], %247 {strides = array<i32>} : memref<16x16x64xf32, #tpu.memory_space<vmem>>, vector<1x16x64xf32>,
    %c1_i32_117 = arith.constant 1 : i32
    %c8_i32_118 = arith.constant 8 : i32
    %248 = arith.addi %c8_i32_118, %c1_i32_117 : i32
    %249 = arith.index_cast %248 : i32 to index
    %c0_119 = arith.constant 0 : index
    %c0_120 = arith.constant 0 : index
    %250 = vector.load %arg15[%249, %c0_119, %c0_120] : memref<16x16x64xf32, #tpu.memory_space<vmem>>, vector<1x16x64xf32>
    %251 = vector.shape_cast %250 : vector<1x16x64xf32> to vector<16x64xf32>
    %252 = arith.mulf %251, %243 : vector<16x64xf32>
    %253 = arith.index_cast %248 : i32 to index
    %c0_121 = arith.constant 0 : index
    %c0_122 = arith.constant 0 : index
    %254 = vector.load %arg16[%253, %c0_121, %c0_122] : memref<16x16x64xf32, #tpu.memory_space<vmem>>, vector<1x16x64xf32>
    %255 = vector.shape_cast %254 : vector<1x16x64xf32> to vector<16x64xf32>
    %256 = arith.addf %252, %255 : vector<16x64xf32>
    %257 = arith.index_cast %248 : i32 to index
    %c0_123 = arith.constant 0 : index
    %c0_124 = arith.constant 0 : index
    %258 = vector.load %arg16[%257, %c0_123, %c0_124] : memref<16x16x64xf32, #tpu.memory_space<vmem>>, vector<1x16x64xf32>
    %259 = vector.shape_cast %258 : vector<1x16x64xf32> to vector<16x64xf32>
    %260 = vector.shape_cast %256 : vector<16x64xf32> to vector<1x16x64xf32>
    tpu.vector_store %arg16[%257, %c0_123, %c0_124], %260 {strides = array<i32>} : memref<16x16x64xf32, #tpu.memory_space<vmem>>, vector<1x16x64xf32>,
    %c2_i32_125 = arith.constant 2 : i32
    %c8_i32_126 = arith.constant 8 : i32
    %261 = arith.addi %c8_i32_126, %c2_i32_125 : i32
    %262 = arith.index_cast %261 : i32 to index
    %c0_127 = arith.constant 0 : index
    %c0_128 = arith.constant 0 : index
    %263 = vector.load %arg15[%262, %c0_127, %c0_128] : memref<16x16x64xf32, #tpu.memory_space<vmem>>, vector<1x16x64xf32>
    %264 = vector.shape_cast %263 : vector<1x16x64xf32> to vector<16x64xf32>
    %265 = arith.mulf %264, %256 : vector<16x64xf32>
    %266 = arith.index_cast %261 : i32 to index
    %c0_129 = arith.constant 0 : index
    %c0_130 = arith.constant 0 : index
    %267 = vector.load %arg16[%266, %c0_129, %c0_130] : memref<16x16x64xf32, #tpu.memory_space<vmem>>, vector<1x16x64xf32>
    %268 = vector.shape_cast %267 : vector<1x16x64xf32> to vector<16x64xf32>
    %269 = arith.addf %265, %268 : vector<16x64xf32>
    %270 = arith.index_cast %261 : i32 to index
    %c0_131 = arith.constant 0 : index
    %c0_132 = arith.constant 0 : index
    %271 = vector.load %arg16[%270, %c0_131, %c0_132] : memref<16x16x64xf32, #tpu.memory_space<vmem>>, vector<1x16x64xf32>
    %272 = vector.shape_cast %271 : vector<1x16x64xf32> to vector<16x64xf32>
    %273 = vector.shape_cast %269 : vector<16x64xf32> to vector<1x16x64xf32>
    tpu.vector_store %arg16[%270, %c0_131, %c0_132], %273 {strides = array<i32>} : memref<16x16x64xf32, #tpu.memory_space<vmem>>, vector<1x16x64xf32>,
    %c3_i32_133 = arith.constant 3 : i32
    %c8_i32_134 = arith.constant 8 : i32
    %274 = arith.addi %c8_i32_134, %c3_i32_133 : i32
    %275 = arith.index_cast %274 : i32 to index
    %c0_135 = arith.constant 0 : index
    %c0_136 = arith.constant 0 : index
    %276 = vector.load %arg15[%275, %c0_135, %c0_136] : memref<16x16x64xf32, #tpu.memory_space<vmem>>, vector<1x16x64xf32>
    %277 = vector.shape_cast %276 : vector<1x16x64xf32> to vector<16x64xf32>
    %278 = arith.mulf %277, %269 : vector<16x64xf32>
    %279 = arith.index_cast %274 : i32 to index
    %c0_137 = arith.constant 0 : index
    %c0_138 = arith.constant 0 : index
    %280 = vector.load %arg16[%279, %c0_137, %c0_138] : memref<16x16x64xf32, #tpu.memory_space<vmem>>, vector<1x16x64xf32>
    %281 = vector.shape_cast %280 : vector<1x16x64xf32> to vector<16x64xf32>
    %282 = arith.addf %278, %281 : vector<16x64xf32>
    %283 = arith.index_cast %274 : i32 to index
    %c0_139 = arith.constant 0 : index
    %c0_140 = arith.constant 0 : index
    %284 = vector.load %arg16[%283, %c0_139, %c0_140] : memref<16x16x64xf32, #tpu.memory_space<vmem>>, vector<1x16x64xf32>
    %285 = vector.shape_cast %284 : vector<1x16x64xf32> to vector<16x64xf32>
    %286 = vector.shape_cast %282 : vector<16x64xf32> to vector<1x16x64xf32>
    tpu.vector_store %arg16[%283, %c0_139, %c0_140], %286 {strides = array<i32>} : memref<16x16x64xf32, #tpu.memory_space<vmem>>, vector<1x16x64xf32>,
    %c4_i32_141 = arith.constant 4 : i32
    %c8_i32_142 = arith.constant 8 : i32
    %287 = arith.addi %c8_i32_142, %c4_i32_141 : i32
    %288 = arith.index_cast %287 : i32 to index
    %c0_143 = arith.constant 0 : index
    %c0_144 = arith.constant 0 : index
    %289 = vector.load %arg15[%288, %c0_143, %c0_144] : memref<16x16x64xf32, #tpu.memory_space<vmem>>, vector<1x16x64xf32>
    %290 = vector.shape_cast %289 : vector<1x16x64xf32> to vector<16x64xf32>
    %291 = arith.mulf %290, %282 : vector<16x64xf32>
    %292 = arith.index_cast %287 : i32 to index
    %c0_145 = arith.constant 0 : index
    %c0_146 = arith.constant 0 : index
    %293 = vector.load %arg16[%292, %c0_145, %c0_146] : memref<16x16x64xf32, #tpu.memory_space<vmem>>, vector<1x16x64xf32>
    %294 = vector.shape_cast %293 : vector<1x16x64xf32> to vector<16x64xf32>
    %295 = arith.addf %291, %294 : vector<16x64xf32>
    %296 = arith.index_cast %287 : i32 to index
    %c0_147 = arith.constant 0 : index
    %c0_148 = arith.constant 0 : index
    %297 = vector.load %arg16[%296, %c0_147, %c0_148] : memref<16x16x64xf32, #tpu.memory_space<vmem>>, vector<1x16x64xf32>
    %298 = vector.shape_cast %297 : vector<1x16x64xf32> to vector<16x64xf32>
    %299 = vector.shape_cast %295 : vector<16x64xf32> to vector<1x16x64xf32>
    tpu.vector_store %arg16[%296, %c0_147, %c0_148], %299 {strides = array<i32>} : memref<16x16x64xf32, #tpu.memory_space<vmem>>, vector<1x16x64xf32>,
    %c5_i32_149 = arith.constant 5 : i32
    %c8_i32_150 = arith.constant 8 : i32
    %300 = arith.addi %c8_i32_150, %c5_i32_149 : i32
    %301 = arith.index_cast %300 : i32 to index
    %c0_151 = arith.constant 0 : index
    %c0_152 = arith.constant 0 : index
    %302 = vector.load %arg15[%301, %c0_151, %c0_152] : memref<16x16x64xf32, #tpu.memory_space<vmem>>, vector<1x16x64xf32>
    %303 = vector.shape_cast %302 : vector<1x16x64xf32> to vector<16x64xf32>
    %304 = arith.mulf %303, %295 : vector<16x64xf32>
    %305 = arith.index_cast %300 : i32 to index
    %c0_153 = arith.constant 0 : index
    %c0_154 = arith.constant 0 : index
    %306 = vector.load %arg16[%305, %c0_153, %c0_154] : memref<16x16x64xf32, #tpu.memory_space<vmem>>, vector<1x16x64xf32>
    %307 = vector.shape_cast %306 : vector<1x16x64xf32> to vector<16x64xf32>
    %308 = arith.addf %304, %307 : vector<16x64xf32>
    %309 = arith.index_cast %300 : i32 to index
    %c0_155 = arith.constant 0 : index
    %c0_156 = arith.constant 0 : index
    %310 = vector.load %arg16[%309, %c0_155, %c0_156] : memref<16x16x64xf32, #tpu.memory_space<vmem>>, vector<1x16x64xf32>
    %311 = vector.shape_cast %310 : vector<1x16x64xf32> to vector<16x64xf32>
    %312 = vector.shape_cast %308 : vector<16x64xf32> to vector<1x16x64xf32>
    tpu.vector_store %arg16[%309, %c0_155, %c0_156], %312 {strides = array<i32>} : memref<16x16x64xf32, #tpu.memory_space<vmem>>, vector<1x16x64xf32>,
    %c6_i32_157 = arith.constant 6 : i32
    %c8_i32_158 = arith.constant 8 : i32
    %313 = arith.addi %c8_i32_158, %c6_i32_157 : i32
    %314 = arith.index_cast %313 : i32 to index
    %c0_159 = arith.constant 0 : index
    %c0_160 = arith.constant 0 : index
    %315 = vector.load %arg15[%314, %c0_159, %c0_160] : memref<16x16x64xf32, #tpu.memory_space<vmem>>, vector<1x16x64xf32>
    %316 = vector.shape_cast %315 : vector<1x16x64xf32> to vector<16x64xf32>
    %317 = arith.mulf %316, %308 : vector<16x64xf32>
    %318 = arith.index_cast %313 : i32 to index
    %c0_161 = arith.constant 0 : index
    %c0_162 = arith.constant 0 : index
    %319 = vector.load %arg16[%318, %c0_161, %c0_162] : memref<16x16x64xf32, #tpu.memory_space<vmem>>, vector<1x16x64xf32>
    %320 = vector.shape_cast %319 : vector<1x16x64xf32> to vector<16x64xf32>
    %321 = arith.addf %317, %320 : vector<16x64xf32>
    %322 = arith.index_cast %313 : i32 to index
    %c0_163 = arith.constant 0 : index
    %c0_164 = arith.constant 0 : index
    %323 = vector.load %arg16[%322, %c0_163, %c0_164] : memref<16x16x64xf32, #tpu.memory_space<vmem>>, vector<1x16x64xf32>
    %324 = vector.shape_cast %323 : vector<1x16x64xf32> to vector<16x64xf32>
    %325 = vector.shape_cast %321 : vector<16x64xf32> to vector<1x16x64xf32>
    tpu.vector_store %arg16[%322, %c0_163, %c0_164], %325 {strides = array<i32>} : memref<16x16x64xf32, #tpu.memory_space<vmem>>, vector<1x16x64xf32>,
    %c7_i32_165 = arith.constant 7 : i32
    %c8_i32_166 = arith.constant 8 : i32
    %326 = arith.addi %c8_i32_166, %c7_i32_165 : i32
    %327 = arith.index_cast %326 : i32 to index
    %c0_167 = arith.constant 0 : index
    %c0_168 = arith.constant 0 : index
    %328 = vector.load %arg15[%327, %c0_167, %c0_168] : memref<16x16x64xf32, #tpu.memory_space<vmem>>, vector<1x16x64xf32>
    %329 = vector.shape_cast %328 : vector<1x16x64xf32> to vector<16x64xf32>
    %330 = arith.mulf %329, %321 : vector<16x64xf32>
    %331 = arith.index_cast %326 : i32 to index
    %c0_169 = arith.constant 0 : index
    %c0_170 = arith.constant 0 : index
    %332 = vector.load %arg16[%331, %c0_169, %c0_170] : memref<16x16x64xf32, #tpu.memory_space<vmem>>, vector<1x16x64xf32>
    %333 = vector.shape_cast %332 : vector<1x16x64xf32> to vector<16x64xf32>
    %334 = arith.addf %330, %333 : vector<16x64xf32>
    %335 = arith.index_cast %326 : i32 to index
    %c0_171 = arith.constant 0 : index
    %c0_172 = arith.constant 0 : index
    %336 = vector.load %arg16[%335, %c0_171, %c0_172] : memref<16x16x64xf32, #tpu.memory_space<vmem>>, vector<1x16x64xf32>
    %337 = vector.shape_cast %336 : vector<1x16x64xf32> to vector<16x64xf32>
    %338 = vector.shape_cast %334 : vector<16x64xf32> to vector<1x16x64xf32>
    tpu.vector_store %arg16[%335, %c0_171, %c0_172], %338 {strides = array<i32>} : memref<16x16x64xf32, #tpu.memory_space<vmem>>, vector<1x16x64xf32>,
    %c8_i32_173 = arith.constant 8 : i32
    %c0_174 = arith.constant 0 : index
    %c0_175 = arith.constant 0 : index
    %c0_176 = arith.constant 0 : index
    %339 = vector.load %arg16[%c0_174, %c0_175, %c0_176] : memref<16x16x64xf32, #tpu.memory_space<vmem>>, vector<16x16x64xf32>
    %340 = vector.shape_cast %92 : vector<16x16xf32> to vector<16x16x1xf32>
    %341 = vector.broadcast %340 : vector<16x16x1xf32> to vector<16x16x64xf32>
    %342 = arith.mulf %339, %341 : vector<16x16x64xf32>
    %cst_177 = arith.constant dense<0.000000e+00> : vector<16x64xf32>
    %343 = vector.multi_reduction <add>, %342, %cst_177 [1] : vector<16x16x64xf32> to vector<16x64xf32>
    %c0_178 = arith.constant 0 : index
    %c0_179 = arith.constant 0 : index
    %344 = vector.load %arg11[%c0_178, %c0_179] : memref<1x64xf32, #tpu.memory_space<vmem>>, vector<1x64xf32>
    %345 = vector.broadcast %344 : vector<1x64xf32> to vector<16x64xf32>
    %346 = arith.mulf %87, %345 : vector<16x64xf32>
    %347 = arith.addf %343, %346 : vector<16x64xf32>
    %348 = arith.negf %22 : vector<16x64xf32>
    %349 = math.exp %348 : vector<16x64xf32>
    %cst_180 = arith.constant 1.000000e+00 : f32
    %350 = vector.broadcast %cst_180 : f32 to vector<16x64xf32>
    %351 = arith.addf %350, %349 : vector<16x64xf32>
    %352 = arith.divf %350, %351 : vector<16x64xf32>
    %353 = arith.mulf %22, %352 : vector<16x64xf32>
    %354 = arith.mulf %347, %353 : vector<16x64xf32>
    %355 = arith.truncf %354 : vector<16x64xf32> to vector<16x64xbf16>
    %c0_181 = arith.constant 0 : index
    %c0_182 = arith.constant 0 : index
    %356 = vector.load %arg12[%c0_181, %c0_182] : memref<64x32xbf16, #tpu.memory_space<vmem>>, vector<64x32xbf16>
    %cst_183 = arith.constant dense<0.000000e+00> : vector<16x32xf32>
    %357 = tpu.matmul %355, %356, %cst_183 {dimension_numbers = #tpu.dot_dimension_numbers<[1], [0], [0], [1], [0, 0, 1, 1], [], []>} : vector<16x64xbf16>, vector<64x32xbf16>, vector<16x32xf32> -> vector<16x32xf32>
    %358 = vector.shape_cast %357 : vector<16x32xf32> to vector<2x8x32xf32>
    %c0_184 = arith.constant 0 : index
    %c0_185 = arith.constant 0 : index
    %c0_186 = arith.constant 0 : index
    %359 = vector.load %arg13[%c0_184, %c0_185, %c0_186] : memref<2x8x32xf32, #tpu.memory_space<vmem>>, vector<2x8x32xf32>
    tpu.vector_store %arg13[%c0_184, %c0_185, %c0_186], %358 {strides = array<i32>} : memref<2x8x32xf32, #tpu.memory_space<vmem>>, vector<2x8x32xf32>,
    %360 = vector.shape_cast %4 : vector<16x32xf32> to vector<2x8x32xf32>
    %c0_187 = arith.constant 0 : index
    %c0_188 = arith.constant 0 : index
    %c0_189 = arith.constant 0 : index
    %361 = vector.load %arg14[%c0_187, %c0_188, %c0_189] : memref<2x8x32xf32, #tpu.memory_space<vmem>>, vector<2x8x32xf32>
    tpu.vector_store %arg14[%c0_187, %c0_188, %c0_189], %360 {strides = array<i32>} : memref<2x8x32xf32, #tpu.memory_space<vmem>>, vector<2x8x32xf32>,
    return
  }
  func.func @transform_0(%arg0: i32) -> (i32, i32, i32) {
    %c0_i32 = arith.constant 0 : i32
    %c0_i32_0 = arith.constant 0 : i32
    %c0_i32_1 = arith.constant 0 : i32
    return %arg0, %c0_i32, %c0_i32_0 : i32, i32, i32
  }
  func.func @transform_1(%arg0: i32) -> (i32, i32, i32) {
    %c0_i32 = arith.constant 0 : i32
    %c0_i32_0 = arith.constant 0 : i32
    %c0_i32_1 = arith.constant 0 : i32
    return %arg0, %c0_i32, %c0_i32_0 : i32, i32, i32
  }
  func.func @transform_2(%arg0: i32) -> (i32, i32) {
    %c0_i32 = arith.constant 0 : i32
    %c0_i32_0 = arith.constant 0 : i32
    %c0_i32_1 = arith.constant 0 : i32
    return %c0_i32, %c0_i32_0 : i32, i32
  }
  func.func @transform_3(%arg0: i32) -> (i32, i32) {
    %c0_i32 = arith.constant 0 : i32
    %c0_i32_0 = arith.constant 0 : i32
    %c0_i32_1 = arith.constant 0 : i32
    return %c0_i32, %c0_i32_0 : i32, i32
  }
  func.func @transform_4(%arg0: i32) -> (i32, i32) {
    %c0_i32 = arith.constant 0 : i32
    %c0_i32_0 = arith.constant 0 : i32
    %c0_i32_1 = arith.constant 0 : i32
    return %c0_i32, %c0_i32_0 : i32, i32
  }
  func.func @transform_5(%arg0: i32) -> (i32, i32) {
    %c0_i32 = arith.constant 0 : i32
    %c0_i32_0 = arith.constant 0 : i32
    %c0_i32_1 = arith.constant 0 : i32
    return %c0_i32, %c0_i32_0 : i32, i32
  }
  func.func @transform_6(%arg0: i32) -> (i32, i32) {
    %c0_i32 = arith.constant 0 : i32
    %c0_i32_0 = arith.constant 0 : i32
    %c0_i32_1 = arith.constant 0 : i32
    return %c0_i32, %c0_i32_0 : i32, i32
  }
  func.func @transform_7(%arg0: i32) -> (i32, i32) {
    %c0_i32 = arith.constant 0 : i32
    %c0_i32_0 = arith.constant 0 : i32
    %c0_i32_1 = arith.constant 0 : i32
    return %c0_i32, %c0_i32_0 : i32, i32
  }
  func.func @transform_8(%arg0: i32) -> (i32, i32) {
    %c0_i32 = arith.constant 0 : i32
    %c0_i32_0 = arith.constant 0 : i32
    %c0_i32_1 = arith.constant 0 : i32
    return %c0_i32, %c0_i32_0 : i32, i32
  }
  func.func @transform_9(%arg0: i32) -> (i32, i32) {
    %c0_i32 = arith.constant 0 : i32
    %c0_i32_0 = arith.constant 0 : i32
    %c0_i32_1 = arith.constant 0 : i32
    return %c0_i32, %c0_i32_0 : i32, i32
  }
  func.func @transform_10(%arg0: i32) -> (i32, i32) {
    %c0_i32 = arith.constant 0 : i32
    %c0_i32_0 = arith.constant 0 : i32
    %c0_i32_1 = arith.constant 0 : i32
    return %c0_i32, %c0_i32_0 : i32, i32
  }
  func.func @transform_11(%arg0: i32) -> (i32, i32) {
    %c0_i32 = arith.constant 0 : i32
    %c0_i32_0 = arith.constant 0 : i32
    %c0_i32_1 = arith.constant 0 : i32
    return %c0_i32, %c0_i32_0 : i32, i32
  }
  func.func @transform_12(%arg0: i32) -> (i32, i32, i32) {
    %c0_i32 = arith.constant 0 : i32
    %c0_i32_0 = arith.constant 0 : i32
    %c0_i32_1 = arith.constant 0 : i32
    return %arg0, %c0_i32, %c0_i32_0 : i32, i32, i32
  }
  func.func @transform_13(%arg0: i32) -> (i32, i32, i32) {
    %c0_i32 = arith.constant 0 : i32
    %c0_i32_0 = arith.constant 0 : i32
    %c0_i32_1 = arith.constant 0 : i32
    return %arg0, %c0_i32, %c0_i32_0 : i32, i32, i32
  }
}

</mosaic_0001>

<llo_original>
// kernel: tpu_custom_call.1
$region0: #{tpu_custom_call.1}
  #allocation0 [shape = 'u32[]', space=smem, size = 0x4, offset = 0x4, fixed_abs, tag = 'smem constant byte address 0x4 - core index']
  #allocation1 [shape = 'u32[144,128]{1,0:T(1,128)}', space=vmem, size = 0x12000, scoped, tag = 'internal scratch']
  #allocation2 [shape = 'f32[16,16,64]{2,1,0:T(8,128)}', space=vmem, size = 0x20000, scoped, tag = 'scratch operand']
  #allocation3 [shape = 'f32[16,16,64]{2,1,0:T(8,128)}', space=vmem, size = 0x20000, scoped, tag = 'scratch operand']
  %s0 = inlined_call_operand.vmem [shape: f32[2,8,32], index: 0, kind: input, shape index: {}]
  %s1 = inlined_call_operand.vmem [shape: f32[2,8,32], index: 1, kind: input, shape index: {}]
  %s2 = inlined_call_operand.vmem [shape: f32[1,32], index: 2, kind: input, shape index: {}]
  %s3 = inlined_call_operand.vmem [shape: bf16[32,128], index: 3, kind: input, shape index: {}]
  %s4 = inlined_call_operand.vmem [shape: f32[4,64], index: 4, kind: input, shape index: {}]
  %s5 = inlined_call_operand.vmem [shape: f32[1,64], index: 5, kind: input, shape index: {}]
  %s6 = inlined_call_operand.vmem [shape: bf16[64,34], index: 6, kind: input, shape index: {}]
  %s7 = inlined_call_operand.vmem [shape: bf16[2,64], index: 7, kind: input, shape index: {}]
  %s8 = inlined_call_operand.vmem [shape: f32[1,64], index: 8, kind: input, shape index: {}]
  %s9 = inlined_call_operand.vmem [shape: f32[16,64], index: 9, kind: input, shape index: {}]
  %s10 = inlined_call_operand.vmem [shape: f32[1,64], index: 10, kind: input, shape index: {}]
  %s11 = inlined_call_operand.vmem [shape: bf16[64,32], index: 11, kind: input, shape index: {}]
  %s12 = inlined_call_operand.hbm [shape: f32[2,8,32], index: 12, kind: output, shape index: {0}]
  %s13 = inlined_call_operand.hbm [shape: f32[2,8,32], index: 13, kind: output, shape index: {1}]
  %14 = xla_tuple %s12, %s13
  %s15 = sld [smem:[#allocation0]]
  $region66: #{tpu_custom_call.1} parent=0
    _
  %s17 = ssub.s32 1, %s15
  %s18 = scalar_select 0, %s17, %s15
  $region1: #{tpu_custom_call.1} parent=0
    #allocation4 [shape = 'u8[8192]{0}', space=vmem, size = 0x2000, scoped, tag = 'output window, operand 0, single buffered']
    #allocation5 [shape = 's32[1]{0}', space=sflag, size = 0x4, scoped, tag = 'scoped memory for tpu_custom_call.1']
    #allocation6 [shape = 'u8[8192]{0}', space=vmem, size = 0x2000, scoped, tag = 'output window, operand 1, single buffered']
    #allocation7 [shape = 's32[1]{0}', space=sflag, size = 0x4, scoped, tag = 'scoped memory for tpu_custom_call.1']
    %19 = vsyncpa [#allocation5], 0
    %20 = vsyncpa [#allocation7], 0
    // Predicated region
    $region2: #{tpu_custom_call.1} parent=1 // pred_check
      _
    $region3: #{tpu_custom_call.1} parent=1 // pred_check_branch
      %22 = sbr.rel (0) target = $region5
    $region4: #{tpu_custom_call.1} parent=1 // pred_region
      _
    $region5: #{tpu_custom_call.1} parent=1 // pred_fallthru
      _
    // Predicated region
    $region6: #{tpu_custom_call.1} parent=1 // pred_check
      _
    $region7: #{tpu_custom_call.1} parent=1 // pred_check_branch
      %24 = sbr.rel (0) target = $region9
    $region8: #{tpu_custom_call.1} parent=1 // pred_region
      _
    $region9: #{tpu_custom_call.1} parent=1 // pred_fallthru
      _
    // Predicated region
    $region10: #{tpu_custom_call.1} parent=1 // pred_check
      _
    $region11: #{tpu_custom_call.1} parent=1 // pred_check_branch
      %26 = sbr.rel (0) target = $region13
    $region12: #{tpu_custom_call.1} parent=1 // pred_region
      _
    $region13: #{tpu_custom_call.1} parent=1 // pred_fallthru
      _
    // Predicated region
    $region14: #{tpu_custom_call.1} parent=1 // pred_check
      _
    $region15: #{tpu_custom_call.1} parent=1 // pred_check_branch
      %28 = sbr.rel (0) target = $region17
    $region16: #{tpu_custom_call.1} parent=1 // pred_region
      _
    $region17: #{tpu_custom_call.1} parent=1 // pred_fallthru
      _
    // Predicated region
    $region18: #{tpu_custom_call.1} parent=1 // pred_check
      _
    $region19: #{tpu_custom_call.1} parent=1 // pred_check_branch
      %30 = sbr.rel (0) target = $region21
    $region20: #{tpu_custom_call.1} parent=1 // pred_region
      _
    $region21: #{tpu_custom_call.1} parent=1 // pred_fallthru
      _
    // Predicated region
    $region22: #{tpu_custom_call.1} parent=1 // pred_check
      _
    $region23: #{tpu_custom_call.1} parent=1 // pred_check_branch
      %32 = sbr.rel (0) target = $region25
    $region24: #{tpu_custom_call.1} parent=1 // pred_region
      _
    $region25: #{tpu_custom_call.1} parent=1 // pred_fallthru
      _
    // Predicated region
    $region26: #{tpu_custom_call.1} parent=1 // pred_check
      _
    $region27: #{tpu_custom_call.1} parent=1 // pred_check_branch
      %34 = sbr.rel (0) target = $region29
    $region28: #{tpu_custom_call.1} parent=1 // pred_region
      _
    $region29: #{tpu_custom_call.1} parent=1 // pred_fallthru
      _
    // Predicated region
    $region30: #{tpu_custom_call.1} parent=1 // pred_check
      _
    $region31: #{tpu_custom_call.1} parent=1 // pred_check_branch
      %36 = sbr.rel (0) target = $region33
    $region32: #{tpu_custom_call.1} parent=1 // pred_region
      _
    $region33: #{tpu_custom_call.1} parent=1 // pred_fallthru
      _
    // Predicated region
    $region34: #{tpu_custom_call.1} parent=1 // pred_check
      _
    $region35: #{tpu_custom_call.1} parent=1 // pred_check_branch
      %38 = sbr.rel (0) target = $region37
    $region36: #{tpu_custom_call.1} parent=1 // pred_region
      _
    $region37: #{tpu_custom_call.1} parent=1 // pred_fallthru
      _
    // Predicated region
    $region38: #{tpu_custom_call.1} parent=1 // pred_check
      _
    $region39: #{tpu_custom_call.1} parent=1 // pred_check_branch
      %40 = sbr.rel (0) target = $region41
    $region40: #{tpu_custom_call.1} parent=1 // pred_region
      _
    $region41: #{tpu_custom_call.1} parent=1 // pred_fallthru
      _
    // Predicated region
    $region42: #{tpu_custom_call.1} parent=1 // pred_check
      _
    $region43: #{tpu_custom_call.1} parent=1 // pred_check_branch
      %42 = sbr.rel (0) target = $region45
    $region44: #{tpu_custom_call.1} parent=1 // pred_region
      _
    $region45: #{tpu_custom_call.1} parent=1 // pred_fallthru
      _
    // Predicated region
    $region46: #{tpu_custom_call.1} parent=1 // pred_check
      _
    $region47: #{tpu_custom_call.1} parent=1 // pred_check_branch
      %44 = sbr.rel (0) target = $region49
    $region48: #{tpu_custom_call.1} parent=1 // pred_region
      _
    $region49: #{tpu_custom_call.1} parent=1 // pred_fallthru
      _
    %v46 = vld [vmem:[%s0] sm:$0xff]
    %v47 = vld [vmem:[%s0 + $0x8] sm:$0xff]
    %v48 = vld [vmem:[%s1] sm:$0xff]
    %v49 = vld [vmem:[%s1 + $0x8] sm:$0xff]
    %v50 = vadd.f32 %v46, %v48
    %v51 = vadd.f32 %v47, %v49
    %v52 = vmul.f32 %v50, %v50
    %v53 = vmul.f32 %v51, %v51
    %vm54 = vcmask 261120
    %v55 = vsel %vm54, %v52, 0.0
    %56 = vadd.xlane.f32.xlu0 %v55
    %v57 = vpop.xlane.xlu0 %56
    %v58 = vsel %vm54, %v53, 0.0
    %59 = vadd.xlane.f32.xlu0 %v58
    %v60 = vpop.xlane.xlu0 %59
    %v61 = vrcp.pop 32.0
    %v62 = vmul.f32 %v57, %v61
    %v63 = vmul.f32 %v60, %v61
    %v64 = vadd.f32 %v62, 1e-05
    %v65 = vadd.f32 %v63, 1e-05
    %v66 = vrsqrt.pop %v64
    %v67 = vrsqrt.pop %v65
    %v68 = vmul.f32 %v50, %v66
    %v69 = vmul.f32 %v51, %v67
    %v70 = vld [vmem:[%s2] sm:$0x1]
    %v72 = vlaneseq
    %v73 = vshrl.u32 %v72, 7
    %v74 = vsub.s32 0, %v73
    %v75 = vrot.slane %v70, %v74
    %v77 = vmul.f32 %v68, %v75
    %v78 = vmul.f32 %v69, %v75
    %v79 = vpack.c.bf16 %v78, %v77
    %v80 = vld [vmem:[%s3] sm:$0xf]
    %v81 = vld [vmem:[%s3 + $0x4] sm:$0xf]
    %v82 = vld [vmem:[%s3 + $0x8] sm:$0xf]
    %v83 = vld [vmem:[%s3 + $0xc] sm:$0xf]
    %v88 = vunpack.c.l.b16 %v80
    %v89 = vunpack.c.l.b16 %v81
    %v90 = vunpack.c.l.b16 %v82
    %v91 = vunpack.c.l.b16 %v83
    %v92 = vpack.c.b16 %v89, %v88
    %v93 = vpack.c.b16 %v91, %v90
    %v97 = vsel %vm54, %v79, 0
    %99 = vmatprep.subr.bf16.mxu0 0
    %100 = vmatpush1.bf16.msra.mxu0 %v92
    %101 = vmatprep.subr.bf16.mxu0 0
    %102 = vmatpush1.bf16.msra.mxu0 %v93
    %103 = vmatprep.subr.bf16.mxu0 0
    %104 = vmatpush1.bf16.msra.mxu0 0
    %105 = vmatprep.subr.bf16.mxu0 0
    %106 = vmatpush1.bf16.msra.mxu0 0
    %107 = vmatprep.subr.bf16.mxu0 0
    %108 = vmatpush1.bf16.msra.mxu0 0
    %109 = vmatprep.subr.bf16.mxu0 0
    %110 = vmatpush1.bf16.msra.mxu0 0
    %111 = vmatprep.subr.bf16.mxu0 0
    %112 = vmatpush1.bf16.msra.mxu0 0
    %113 = vmatprep.subr.bf16.mxu0 0
    %114 = vmatpush1.bf16.msra.mxu0 0
    %115 = vmatprep.subr.bf16.mxu0 0
    %116 = vmatpush1.bf16.msra.mxu0 0
    %117 = vmatprep.subr.bf16.mxu0 0
    %118 = vmatpush1.bf16.msra.mxu0 0
    %119 = vmatprep.subr.bf16.mxu0 0
    %120 = vmatpush1.bf16.msra.mxu0 0
    %121 = vmatprep.subr.bf16.mxu0 0
    %122 = vmatpush1.bf16.msra.mxu0 0
    %123 = vmatprep.subr.bf16.mxu0 0
    %124 = vmatpush1.bf16.msra.mxu0 0
    %125 = vmatprep.subr.bf16.mxu0 0
    %126 = vmatpush1.bf16.msra.mxu0 0
    %127 = vmatprep.subr.bf16.mxu0 0
    %128 = vmatpush1.bf16.msra.mxu0 0
    %129 = vmatprep.subr.bf16.mxu0 0
    %130 = vmatpush1.bf16.msra.mxu0 0
    %131 = vmatprep.mubr.bf16.mxu0 0
    %132 = vmatmul.mubr.bf16.gmra.mrb[0].mxu0 %v97
    %v133 = vpop.f32.mrb[0].mxu0
    %v134 = vadd.f32 0.0, %v133
    %v135 = vpop.f32.mrb[0].mxu0
    %v136 = vpop.f32.mrb[0].mxu0
    %v137 = vadd.f32 0.0, %v136
    %v138 = vpop.f32.mrb[0].mxu0
    %139 = vdwg.mxu0
    %v140 = vld [vmem:[%s4] sm:$0xf]
    %v141 = vlaneseq
    %v142 = vshrl.u32 %v141, 7
    %v143 = vadd.s32 %v142, 8
    %vm144 = vcmp.lt.s32.totalorder %v142, 0
    %v145 = vsub.s32 0, %v142
    %v146 = vsel %vm144, %v145, %v142
    %v147 = vshrl.u32 %v146, 3
    %v148 = vand.u32 %v146, 7
    %v149 = vsub.s32 0, %v148
    %v150 = vsel %vm144, %v149, %v148
    %vm151 = vcmp.lt.s32.totalorder %v143, 0
    %v152 = vsub.s32 0, %v143
    %v153 = vsel %vm151, %v152, %v143
    %v154 = vshrl.u32 %v153, 3
    %v155 = vand.u32 %v153, 7
    %v156 = vsub.s32 0, %v155
    %v157 = vsel %vm151, %v156, %v155
    %vm158 = vcmp.ne.s32.totalorder %v150, 0
    %vm159 = vcmp.ne.s32.totalorder %v157, 0
    %vm160 = vcmp.lt.s32.totalorder %v150, 0
    %vm161 = vcmp.lt.s32.totalorder %v157, 0
    %vm162 = vmand %vm160, %vm158
    %vm163 = vmand %vm161, %vm159
    %v164 = vadd.s32 %v150, 8
    %v165 = vadd.s32 %v157, 8
    %v166 = vsel %vm162, %v164, %v150
    %v167 = vsel %vm163, %v165, %v157
    %v168 = vld [vmem:[%s5] sm:$0x1]
    %v170 = vlaneseq
    %v171 = vshrl.u32 %v170, 7
    %v172 = vsub.s32 0, %v171
    %v173 = vrot.slane %v168, %v172
    %v175 = vadd.f32 %v173, 0.0
    %v176 = vlaneseq
    %v177 = vshrl.u32 %v176, 7
    %v178 = vsub.s32 3, %v177
    %v179 = vrot.slane %v140, %v178
    %v180 = vmul.f32 %v134, %v179
    %v181 = vmul.f32 %v137, %v179
    %v182 = vadd.f32 %v175, %v180
    %v183 = vadd.f32 %v175, %v181
    %v184 = vrot.slane %v134, 7
    %v185 = vrot.slane %v137, 7
    %vm186 = vcmp.lt.s32.totalorder %v142, 1
    %v187 = vsel %vm186, %v184, %v185
    %v188 = vsel %vm186, %v185, %v184
    %vm189 = vcmp.ge.s32.totalorder %v166, 1
    %vm190 = vcmp.ge.s32.totalorder %v167, 1
    %v191 = vsel %vm189, 1, 0
    %v192 = vsel %vm190, 1, 0
    %vm193 = vcmp.eq.s32.totalorder %v191, 1
    %vm194 = vcmp.eq.s32.totalorder %v192, 1
    %v195 = vsel %vm193, %v188, 0.0
    %v196 = vsel %vm194, %v187, 0.0
    %v197 = vlaneseq
    %v198 = vshrl.u32 %v197, 7
    %v199 = vsub.s32 2, %v198
    %v200 = vrot.slane %v140, %v199
    %v201 = vmul.f32 %v195, %v200
    %v202 = vmul.f32 %v196, %v200
    %v203 = vadd.f32 %v182, %v201
    %v204 = vadd.f32 %v183, %v202
    %v205 = vrot.slane %v134, 6
    %v206 = vrot.slane %v137, 6
    %vm207 = vcmp.lt.s32.totalorder %v142, 2
    %v208 = vsel %vm207, %v205, %v206
    %v209 = vsel %vm207, %v206, %v205
    %vm210 = vcmp.ge.s32.totalorder %v166, 2
    %vm211 = vcmp.ge.s32.totalorder %v167, 2
    %v212 = vsel %vm210, 1, 0
    %v213 = vsel %vm211, 1, 0
    %vm214 = vcmp.eq.s32.totalorder %v212, 1
    %vm215 = vcmp.eq.s32.totalorder %v213, 1
    %v216 = vsel %vm214, %v209, 0.0
    %v217 = vsel %vm215, %v208, 0.0
    %v218 = vlaneseq
    %v219 = vshrl.u32 %v218, 7
    %v220 = vsub.s32 1, %v219
    %v221 = vrot.slane %v140, %v220
    %v222 = vmul.f32 %v216, %v221
    %v223 = vmul.f32 %v217, %v221
    %v224 = vadd.f32 %v203, %v222
    %v225 = vadd.f32 %v204, %v223
    %v226 = vrot.slane %v134, 5
    %v227 = vrot.slane %v137, 5
    %vm228 = vcmp.lt.s32.totalorder %v142, 3
    %v229 = vsel %vm228, %v226, %v227
    %v230 = vsel %vm228, %v227, %v226
    %vm231 = vcmp.ge.s32.totalorder %v166, 3
    %vm232 = vcmp.ge.s32.totalorder %v167, 3
    %v233 = vsel %vm231, 1, 0
    %v234 = vsel %vm232, 1, 0
    %vm235 = vcmp.eq.s32.totalorder %v233, 1
    %vm236 = vcmp.eq.s32.totalorder %v234, 1
    %v237 = vsel %vm235, %v230, 0.0
    %v238 = vsel %vm236, %v229, 0.0
    %v239 = vlaneseq
    %v240 = vshrl.u32 %v239, 7
    %v241 = vsub.s32 0, %v240
    %v242 = vrot.slane %v140, %v241
    %v243 = vmul.f32 %v237, %v242
    %v244 = vmul.f32 %v238, %v242
    %v245 = vadd.f32 %v224, %v243
    %v246 = vadd.f32 %v225, %v244
    %v247 = vxor.u32 %v245, 2147483648
    %v248 = vxor.u32 %v246, 2147483648
    %v249 = vmul.f32 %v247, 1.442695
    %v250 = vpow.pop %v249
    %v251 = vmul.f32 %v248, 1.442695
    %v252 = vpow.pop %v251
    %v253 = vadd.f32 %v250, 1.0
    %v254 = vadd.f32 %v252, 1.0
    %v255 = vrcp.pop %v253
    %v256 = vmul.f32 1.0, %v255
    %v257 = vrcp.pop %v254
    %v258 = vmul.f32 1.0, %v257
    %v259 = vmul.f32 %v245, %v256
    %v260 = vmul.f32 %v246, %v258
    %v261 = vpack.c.bf16 %v260, %v259
    %v262 = vld [vmem:[%s6] sm:$0xf]
    %v263 = vld [vmem:[%s6 + $0x4] sm:$0xf]
    %v264 = vld [vmem:[%s6 + $0x8] sm:$0xf]
    %v265 = vld [vmem:[%s6 + $0xc] sm:$0xf]
    %v266 = vld [vmem:[%s6 + $0x10] sm:$0xf]
    %v267 = vld [vmem:[%s6 + $0x14] sm:$0xf]
    %v268 = vld [vmem:[%s6 + $0x18] sm:$0xf]
    %v269 = vld [vmem:[%s6 + $0x1c] sm:$0xf]
    %v278 = vunpack.c.l.b16 %v262
    %v279 = vunpack.c.l.b16 %v263
    %v280 = vunpack.c.l.b16 %v264
    %v281 = vunpack.c.l.b16 %v265
    %v282 = vunpack.c.l.b16 %v266
    %v283 = vunpack.c.l.b16 %v267
    %v284 = vunpack.c.l.b16 %v268
    %v285 = vunpack.c.l.b16 %v269
    %v286 = vpack.c.b16 %v279, %v278
    %v287 = vpack.c.b16 %v281, %v280
    %v288 = vpack.c.b16 %v283, %v282
    %v289 = vpack.c.b16 %v285, %v284
    %vm294 = vcmask 523264
    %v296 = vsel %vm294, %v261, 0
    %298 = vmatprep.subr.bf16.mxu0 0
    %299 = vmatpush1.bf16.msra.mxu0 %v286
    %300 = vmatprep.subr.bf16.mxu0 0
    %301 = vmatpush1.bf16.msra.mxu0 %v287
    %302 = vmatprep.subr.bf16.mxu0 0
    %303 = vmatpush1.bf16.msra.mxu0 %v288
    %304 = vmatprep.subr.bf16.mxu0 0
    %305 = vmatpush1.bf16.msra.mxu0 %v289
    %306 = vmatprep.subr.bf16.mxu0 0
    %307 = vmatpush1.bf16.msra.mxu0 0
    %308 = vmatprep.subr.bf16.mxu0 0
    %309 = vmatpush1.bf16.msra.mxu0 0
    %310 = vmatprep.subr.bf16.mxu0 0
    %311 = vmatpush1.bf16.msra.mxu0 0
    %312 = vmatprep.subr.bf16.mxu0 0
    %313 = vmatpush1.bf16.msra.mxu0 0
    %314 = vmatprep.subr.bf16.mxu0 0
    %315 = vmatpush1.bf16.msra.mxu0 0
    %316 = vmatprep.subr.bf16.mxu0 0
    %317 = vmatpush1.bf16.msra.mxu0 0
    %318 = vmatprep.subr.bf16.mxu0 0
    %319 = vmatpush1.bf16.msra.mxu0 0
    %320 = vmatprep.subr.bf16.mxu0 0
    %321 = vmatpush1.bf16.msra.mxu0 0
    %322 = vmatprep.subr.bf16.mxu0 0
    %323 = vmatpush1.bf16.msra.mxu0 0
    %324 = vmatprep.subr.bf16.mxu0 0
    %325 = vmatpush1.bf16.msra.mxu0 0
    %326 = vmatprep.subr.bf16.mxu0 0
    %327 = vmatpush1.bf16.msra.mxu0 0
    %328 = vmatprep.subr.bf16.mxu0 0
    %329 = vmatpush1.bf16.msra.mxu0 0
    %330 = vmatprep.mubr.bf16.mxu0 0
    %331 = vmatmul.mubr.bf16.gmra.mrb[0].mxu0 %v296
    %v332 = vpop.f32.mrb[0].mxu0
    %v333 = vadd.f32 0.0, %v332
    %v334 = vpop.f32.mrb[0].mxu0
    %v335 = vpop.f32.mrb[0].mxu0
    %v336 = vadd.f32 0.0, %v335
    %v337 = vpop.f32.mrb[0].mxu0
    %338 = vdwg.mxu0
    %v339 = vpack.c.bf16 %v336, %v333
    %v340 = vld [vmem:[%s7] sm:$0x1]
    %v341 = vld [vmem:[%s8] sm:$0x1]
    %v343 = vlaneseq
    %v344 = vshrl.u32 %v343, 7
    %v345 = vsub.s32 0, %v344
    %v346 = vrot.slane %v341, %v345
    %349 = vrot.lane.b32.xlu0 %v339, 96
    %v350 = vpop.permute.xlu0 %349
    %vm351 = vcmask 15360
    %v353 = vsel %vm351, %v350, 0
    %vm355 = vcmask 1040384
    %v357 = vsel %vm355, %v340, 0
    %359 = vmatprep.subr.bf16.mxu0 0
    %360 = vmatpush1.bf16.msra.mxu0 %v357
    %361 = vmatprep.subr.bf16.mxu0 0
    %362 = vmatpush1.bf16.msra.mxu0 0
    %363 = vmatprep.subr.bf16.mxu0 0
    %364 = vmatpush1.bf16.msra.mxu0 0
    %365 = vmatprep.subr.bf16.mxu0 0
    %366 = vmatpush1.bf16.msra.mxu0 0
    %367 = vmatprep.subr.bf16.mxu0 0
    %368 = vmatpush1.bf16.msra.mxu0 0
    %369 = vmatprep.subr.bf16.mxu0 0
    %370 = vmatpush1.bf16.msra.mxu0 0
    %371 = vmatprep.subr.bf16.mxu0 0
    %372 = vmatpush1.bf16.msra.mxu0 0
    %373 = vmatprep.subr.bf16.mxu0 0
    %374 = vmatpush1.bf16.msra.mxu0 0
    %375 = vmatprep.subr.bf16.mxu0 0
    %376 = vmatpush1.bf16.msra.mxu0 0
    %377 = vmatprep.subr.bf16.mxu0 0
    %378 = vmatpush1.bf16.msra.mxu0 0
    %379 = vmatprep.subr.bf16.mxu0 0
    %380 = vmatpush1.bf16.msra.mxu0 0
    %381 = vmatprep.subr.bf16.mxu0 0
    %382 = vmatpush1.bf16.msra.mxu0 0
    %383 = vmatprep.subr.bf16.mxu0 0
    %384 = vmatpush1.bf16.msra.mxu0 0
    %385 = vmatprep.subr.bf16.mxu0 0
    %386 = vmatpush1.bf16.msra.mxu0 0
    %387 = vmatprep.subr.bf16.mxu0 0
    %388 = vmatpush1.bf16.msra.mxu0 0
    %389 = vmatprep.subr.bf16.mxu0 0
    %390 = vmatpush1.bf16.msra.mxu0 0
    %391 = vmatprep.mubr.bf16.mxu0 0
    %392 = vmatmul.mubr.bf16.gmra.mrb[0].mxu0 %v353
    %v393 = vpop.f32.mrb[0].mxu0
    %v394 = vadd.f32 %v346, %v393
    %v395 = vpop.f32.mrb[0].mxu0
    %v396 = vpop.f32.mrb[0].mxu0
    %v397 = vadd.f32 %v346, %v396
    %v398 = vpop.f32.mrb[0].mxu0
    %399 = vdwg.mxu0
    %v400 = vmax.f32 %v394, 0.0
    %v401 = vmax.f32 %v397, 0.0
    %vm402 = vcmp.ne.f32.partialorder %v394, %v394
    %vm403 = vcmp.ne.f32.partialorder %v397, %v397
    %v404 = vadd.f32 %v394, 0.0
    %v405 = vadd.f32 %v397, 0.0
    %v406 = vand.u32 2147483647, %v394
    %v407 = vand.u32 2147483647, %v397
    %v408 = vsub.f32 0.0, %v406
    %v409 = vsub.f32 0.0, %v407
    %v410 = vmul.f32 %v408, 1.442695
    %v411 = vpow.pop %v410
    %v412 = vmul.f32 %v409, 1.442695
    %v413 = vpow.pop %v412
    %v414 = vadd.f32 %v411, 1.0
    %v415 = vlog2.pop %v414
    %v416 = vmul.f32 %v415, 0.6931472
    %v417 = vmul.f32 -0.5, %v411
    %v418 = vadd.f32 %v417, 1.0
    %v419 = vmul.f32 %v418, %v411
    %v420 = vand.u32 2147483647, %v411
    %vm421 = vcmp.lt.f32.partialorder %v420, 0.0004427343
    %v422 = vsel %vm421, %v419, %v416
    %v423 = vadd.f32 %v413, 1.0
    %v424 = vlog2.pop %v423
    %v425 = vmul.f32 %v424, 0.6931472
    %v426 = vmul.f32 -0.5, %v413
    %v427 = vadd.f32 %v426, 1.0
    %v428 = vmul.f32 %v427, %v413
    %v429 = vand.u32 2147483647, %v413
    %vm430 = vcmp.lt.f32.partialorder %v429, 0.0004427343
    %v431 = vsel %vm430, %v428, %v425
    %v432 = vadd.f32 %v400, %v422
    %v433 = vadd.f32 %v401, %v431
    %v434 = vsel %vm402, %v404, %v432
    %v435 = vsel %vm403, %v405, %v433
    %v438 = vcombine.high %v434, %v434
    %v440 = vunpack.c.l.s4 1966171168
    %v441 = vunpack.c.0.s8 %v440
    %v442 = vlaneseq
    %v443 = vshrl.u32 %v442, 7
    %v444 = vsub.s32 %v441, %v443
    %v445 = vrot.slane %v434, %v444
    %v447 = vunpack.c.l.s4 1966171168
    %v448 = vunpack.c.0.s8 %v447
    %v449 = vlaneseq
    %v450 = vshrl.u32 %v449, 7
    %v451 = vsub.s32 %v448, %v450
    %v452 = vrot.slane %v438, %v451
    %v453 = vcombine.high %v445, %v445
    %v454 = vcombine.high %v452, %v452
    %v456 = vunpack.c.l.s4 1966171168
    %v457 = vunpack.c.0.s8 %v456
    %v458 = vlaneseq
    %v459 = vshrl.u32 %v458, 7
    %v460 = vsub.s32 %v457, %v459
    %v461 = vrot.slane %v445, %v460
    %v463 = vunpack.c.l.s4 1966171168
    %v464 = vunpack.c.0.s8 %v463
    %v465 = vlaneseq
    %v466 = vshrl.u32 %v465, 7
    %v467 = vsub.s32 %v464, %v466
    %v468 = vrot.slane %v452, %v467
    %v470 = vunpack.c.l.s4 1966171168
    %v471 = vunpack.c.0.s8 %v470
    %v472 = vlaneseq
    %v473 = vshrl.u32 %v472, 7
    %v474 = vsub.s32 %v471, %v473
    %v475 = vrot.slane %v453, %v474
    %v477 = vunpack.c.l.s4 1966171168
    %v478 = vunpack.c.0.s8 %v477
    %v479 = vlaneseq
    %v480 = vshrl.u32 %v479, 7
    %v481 = vsub.s32 %v478, %v480
    %v482 = vrot.slane %v454, %v481
    %v483 = vcombine.high %v461, %v461
    %v484 = vcombine.high %v468, %v468
    %v485 = vcombine.high %v475, %v475
    %v486 = vcombine.high %v482, %v482
    %v487 = vcombine.high %v435, %v435
    %v489 = vunpack.c.l.s4 1966171168
    %v490 = vunpack.c.0.s8 %v489
    %v491 = vlaneseq
    %v492 = vshrl.u32 %v491, 7
    %v493 = vsub.s32 %v490, %v492
    %v494 = vrot.slane %v435, %v493
    %v496 = vunpack.c.l.s4 1966171168
    %v497 = vunpack.c.0.s8 %v496
    %v498 = vlaneseq
    %v499 = vshrl.u32 %v498, 7
    %v500 = vsub.s32 %v497, %v499
    %v501 = vrot.slane %v487, %v500
    %v502 = vcombine.high %v494, %v494
    %v503 = vcombine.high %v501, %v501
    %v505 = vunpack.c.l.s4 1966171168
    %v506 = vunpack.c.0.s8 %v505
    %v507 = vlaneseq
    %v508 = vshrl.u32 %v507, 7
    %v509 = vsub.s32 %v506, %v508
    %v510 = vrot.slane %v494, %v509
    %v512 = vunpack.c.l.s4 1966171168
    %v513 = vunpack.c.0.s8 %v512
    %v514 = vlaneseq
    %v515 = vshrl.u32 %v514, 7
    %v516 = vsub.s32 %v513, %v515
    %v517 = vrot.slane %v501, %v516
    %v519 = vunpack.c.l.s4 1966171168
    %v520 = vunpack.c.0.s8 %v519
    %v521 = vlaneseq
    %v522 = vshrl.u32 %v521, 7
    %v523 = vsub.s32 %v520, %v522
    %v524 = vrot.slane %v502, %v523
    %v526 = vunpack.c.l.s4 1966171168
    %v527 = vunpack.c.0.s8 %v526
    %v528 = vlaneseq
    %v529 = vshrl.u32 %v528, 7
    %v530 = vsub.s32 %v527, %v529
    %v531 = vrot.slane %v503, %v530
    %v532 = vcombine.high %v510, %v510
    %v533 = vcombine.high %v517, %v517
    %v534 = vcombine.high %v524, %v524
    %v535 = vcombine.high %v531, %v531
    %v536 = vld [vmem:[%s9] sm:$0xff]
    %v537 = vld [vmem:[%s9 + $0x8] sm:$0xff]
    %v538 = vlaneseq
    %v539 = vshrl.u32 %v538, 7
    %v540 = vsub.s32 0, %v539
    %v541 = vrot.slane %v461, %v540
    %v542 = vlaneseq
    %v543 = vshrl.u32 %v542, 7
    %v544 = vsub.s32 0, %v543
    %v545 = vrot.slane %v475, %v544
    %v546 = vlaneseq
    %v547 = vshrl.u32 %v546, 7
    %v548 = vsub.s32 0, %v547
    %v549 = vrot.slane %v483, %v548
    %v550 = vlaneseq
    %v551 = vshrl.u32 %v550, 7
    %v552 = vsub.s32 0, %v551
    %v553 = vrot.slane %v485, %v552
    %v554 = vlaneseq
    %v555 = vshrl.u32 %v554, 7
    %v556 = vsub.s32 0, %v555
    %v557 = vrot.slane %v468, %v556
    %v558 = vlaneseq
    %v559 = vshrl.u32 %v558, 7
    %v560 = vsub.s32 0, %v559
    %v561 = vrot.slane %v482, %v560
    %v562 = vlaneseq
    %v563 = vshrl.u32 %v562, 7
    %v564 = vsub.s32 0, %v563
    %v565 = vrot.slane %v484, %v564
    %v566 = vlaneseq
    %v567 = vshrl.u32 %v566, 7
    %v568 = vsub.s32 0, %v567
    %v569 = vrot.slane %v486, %v568
    %v570 = vlaneseq
    %v571 = vshrl.u32 %v570, 7
    %v572 = vsub.s32 0, %v571
    %v573 = vrot.slane %v510, %v572
    %v574 = vlaneseq
    %v575 = vshrl.u32 %v574, 7
    %v576 = vsub.s32 0, %v575
    %v577 = vrot.slane %v524, %v576
    %v578 = vlaneseq
    %v579 = vshrl.u32 %v578, 7
    %v580 = vsub.s32 0, %v579
    %v581 = vrot.slane %v532, %v580
    %v582 = vlaneseq
    %v583 = vshrl.u32 %v582, 7
    %v584 = vsub.s32 0, %v583
    %v585 = vrot.slane %v534, %v584
    %v586 = vlaneseq
    %v587 = vshrl.u32 %v586, 7
    %v588 = vsub.s32 0, %v587
    %v589 = vrot.slane %v517, %v588
    %v590 = vlaneseq
    %v591 = vshrl.u32 %v590, 7
    %v592 = vsub.s32 0, %v591
    %v593 = vrot.slane %v531, %v592
    %v594 = vlaneseq
    %v595 = vshrl.u32 %v594, 7
    %v596 = vsub.s32 0, %v595
    %v597 = vrot.slane %v533, %v596
    %v598 = vlaneseq
    %v599 = vshrl.u32 %v598, 7
    %v600 = vsub.s32 0, %v599
    %v601 = vrot.slane %v535, %v600
    %v618 = vmul.f32 %v541, %v536
    %v619 = vmul.f32 %v541, %v537
    %v620 = vmul.f32 %v545, %v536
    %v621 = vmul.f32 %v545, %v537
    %v622 = vmul.f32 %v549, %v536
    %v623 = vmul.f32 %v549, %v537
    %v624 = vmul.f32 %v553, %v536
    %v625 = vmul.f32 %v553, %v537
    %v626 = vmul.f32 %v557, %v536
    %v627 = vmul.f32 %v557, %v537
    %v628 = vmul.f32 %v561, %v536
    %v629 = vmul.f32 %v561, %v537
    %v630 = vmul.f32 %v565, %v536
    %v631 = vmul.f32 %v565, %v537
    %v632 = vmul.f32 %v569, %v536
    %v633 = vmul.f32 %v569, %v537
    %v634 = vmul.f32 %v573, %v536
    %v635 = vmul.f32 %v573, %v537
    %v636 = vmul.f32 %v577, %v536
    %v637 = vmul.f32 %v577, %v537
    %v638 = vmul.f32 %v581, %v536
    %v639 = vmul.f32 %v581, %v537
    %v640 = vmul.f32 %v585, %v536
    %v641 = vmul.f32 %v585, %v537
    %v642 = vmul.f32 %v589, %v536
    %v643 = vmul.f32 %v589, %v537
    %v644 = vmul.f32 %v593, %v536
    %v645 = vmul.f32 %v593, %v537
    %v646 = vmul.f32 %v597, %v536
    %v647 = vmul.f32 %v597, %v537
    %v648 = vmul.f32 %v601, %v536
    %v649 = vmul.f32 %v601, %v537
    %v650 = vmul.f32 %v618, 1.442695
    %v651 = vpow.pop %v650
    %v652 = vmul.f32 %v619, 1.442695
    %v653 = vpow.pop %v652
    %v654 = vmul.f32 %v620, 1.442695
    %v655 = vpow.pop %v654
    %v656 = vmul.f32 %v621, 1.442695
    %v657 = vpow.pop %v656
    %v658 = vmul.f32 %v622, 1.442695
    %v659 = vpow.pop %v658
    %v660 = vmul.f32 %v623, 1.442695
    %v661 = vpow.pop %v660
    %v662 = vmul.f32 %v624, 1.442695
    %v663 = vpow.pop %v662
    %v664 = vmul.f32 %v625, 1.442695
    %v665 = vpow.pop %v664
    %v666 = vmul.f32 %v626, 1.442695
    %v667 = vpow.pop %v666
    %v668 = vmul.f32 %v627, 1.442695
    %v669 = vpow.pop %v668
    %v670 = vmul.f32 %v628, 1.442695
    %v671 = vpow.pop %v670
    %v672 = vmul.f32 %v629, 1.442695
    %v673 = vpow.pop %v672
    %v674 = vmul.f32 %v630, 1.442695
    %v675 = vpow.pop %v674
    %v676 = vmul.f32 %v631, 1.442695
    %v677 = vpow.pop %v676
    %v678 = vmul.f32 %v632, 1.442695
    %v679 = vpow.pop %v678
    %v680 = vmul.f32 %v633, 1.442695
    %v681 = vpow.pop %v680
    %v682 = vmul.f32 %v634, 1.442695
    %v683 = vpow.pop %v682
    %v684 = vmul.f32 %v635, 1.442695
    %v685 = vpow.pop %v684
    %v686 = vmul.f32 %v636, 1.442695
    %v687 = vpow.pop %v686
    %v688 = vmul.f32 %v637, 1.442695
    %v689 = vpow.pop %v688
    %v690 = vmul.f32 %v638, 1.442695
    %v691 = vpow.pop %v690
    %v692 = vmul.f32 %v639, 1.442695
    %v693 = vpow.pop %v692
    %v694 = vmul.f32 %v640, 1.442695
    %v695 = vpow.pop %v694
    %v696 = vmul.f32 %v641, 1.442695
    %v697 = vpow.pop %v696
    %v698 = vmul.f32 %v642, 1.442695
    %v699 = vpow.pop %v698
    %v700 = vmul.f32 %v643, 1.442695
    %v701 = vpow.pop %v700
    %v702 = vmul.f32 %v644, 1.442695
    %v703 = vpow.pop %v702
    %v704 = vmul.f32 %v645, 1.442695
    %v705 = vpow.pop %v704
    %v706 = vmul.f32 %v646, 1.442695
    %v707 = vpow.pop %v706
    %v708 = vmul.f32 %v647, 1.442695
    %v709 = vpow.pop %v708
    %v710 = vmul.f32 %v648, 1.442695
    %v711 = vpow.pop %v710
    %v712 = vmul.f32 %v649, 1.442695
    %v713 = vpow.pop %v712
    %714 = vst.msk [vmem:[#allocation2] sm:$0xff] %vm294, %v651
    %715 = vst.msk [vmem:[#allocation2 + $0x8] sm:$0xff] %vm294, %v653
    %716 = vst.msk [vmem:[#allocation2 + $0x10] sm:$0xff] %vm294, %v655
    %717 = vst.msk [vmem:[#allocation2 + $0x18] sm:$0xff] %vm294, %v657
    %718 = vst.msk [vmem:[#allocation2 + $0x20] sm:$0xff] %vm294, %v659
    %719 = vst.msk [vmem:[#allocation2 + $0x28] sm:$0xff] %vm294, %v661
    %720 = vst.msk [vmem:[#allocation2 + $0x30] sm:$0xff] %vm294, %v663
    %721 = vst.msk [vmem:[#allocation2 + $0x38] sm:$0xff] %vm294, %v665
    %722 = vst.msk [vmem:[#allocation2 + $0x40] sm:$0xff] %vm294, %v667
    %723 = vst.msk [vmem:[#allocation2 + $0x48] sm:$0xff] %vm294, %v669
    %724 = vst.msk [vmem:[#allocation2 + $0x50] sm:$0xff] %vm294, %v671
    %725 = vst.msk [vmem:[#allocation2 + $0x58] sm:$0xff] %vm294, %v673
    %726 = vst.msk [vmem:[#allocation2 + $0x60] sm:$0xff] %vm294, %v675
    %727 = vst.msk [vmem:[#allocation2 + $0x68] sm:$0xff] %vm294, %v677
    %728 = vst.msk [vmem:[#allocation2 + $0x70] sm:$0xff] %vm294, %v679
    %729 = vst.msk [vmem:[#allocation2 + $0x78] sm:$0xff] %vm294, %v681
    %730 = vst.msk [vmem:[#allocation2 + $0x80] sm:$0xff] %vm294, %v683
    %731 = vst.msk [vmem:[#allocation2 + $0x88] sm:$0xff] %vm294, %v685
    %732 = vst.msk [vmem:[#allocation2 + $0x90] sm:$0xff] %vm294, %v687
    %733 = vst.msk [vmem:[#allocation2 + $0x98] sm:$0xff] %vm294, %v689
    %734 = vst.msk [vmem:[#allocation2 + $0xa0] sm:$0xff] %vm294, %v691
    %735 = vst.msk [vmem:[#allocation2 + $0xa8] sm:$0xff] %vm294, %v693
    %736 = vst.msk [vmem:[#allocation2 + $0xb0] sm:$0xff] %vm294, %v695
    %737 = vst.msk [vmem:[#allocation2 + $0xb8] sm:$0xff] %vm294, %v697
    %738 = vst.msk [vmem:[#allocation2 + $0xc0] sm:$0xff] %vm294, %v699
    %739 = vst.msk [vmem:[#allocation2 + $0xc8] sm:$0xff] %vm294, %v701
    %740 = vst.msk [vmem:[#allocation2 + $0xd0] sm:$0xff] %vm294, %v703
    %741 = vst.msk [vmem:[#allocation2 + $0xd8] sm:$0xff] %vm294, %v705
    %742 = vst.msk [vmem:[#allocation2 + $0xe0] sm:$0xff] %vm294, %v707
    %743 = vst.msk [vmem:[#allocation2 + $0xe8] sm:$0xff] %vm294, %v709
    %744 = vst.msk [vmem:[#allocation2 + $0xf0] sm:$0xff] %vm294, %v711
    %745 = vst.msk [vmem:[#allocation2 + $0xf8] sm:$0xff] %vm294, %v713
    %v746 = vmul.f32 %v434, %v259
    %v747 = vmul.f32 %v435, %v260
    %v750 = vcombine.high %v746, %v746
    %v752 = vunpack.c.l.s4 1966171168
    %v753 = vunpack.c.0.s8 %v752
    %v754 = vlaneseq
    %v755 = vshrl.u32 %v754, 7
    %v756 = vsub.s32 %v753, %v755
    %v757 = vrot.slane %v746, %v756
    %v759 = vunpack.c.l.s4 1966171168
    %v760 = vunpack.c.0.s8 %v759
    %v761 = vlaneseq
    %v762 = vshrl.u32 %v761, 7
    %v763 = vsub.s32 %v760, %v762
    %v764 = vrot.slane %v750, %v763
    %v765 = vcombine.high %v757, %v757
    %v766 = vcombine.high %v764, %v764
    %v768 = vunpack.c.l.s4 1966171168
    %v769 = vunpack.c.0.s8 %v768
    %v770 = vlaneseq
    %v771 = vshrl.u32 %v770, 7
    %v772 = vsub.s32 %v769, %v771
    %v773 = vrot.slane %v757, %v772
    %v775 = vunpack.c.l.s4 1966171168
    %v776 = vunpack.c.0.s8 %v775
    %v777 = vlaneseq
    %v778 = vshrl.u32 %v777, 7
    %v779 = vsub.s32 %v776, %v778
    %v780 = vrot.slane %v764, %v779
    %v782 = vunpack.c.l.s4 1966171168
    %v783 = vunpack.c.0.s8 %v782
    %v784 = vlaneseq
    %v785 = vshrl.u32 %v784, 7
    %v786 = vsub.s32 %v783, %v785
    %v787 = vrot.slane %v765, %v786
    %v789 = vunpack.c.l.s4 1966171168
    %v790 = vunpack.c.0.s8 %v789
    %v791 = vlaneseq
    %v792 = vshrl.u32 %v791, 7
    %v793 = vsub.s32 %v790, %v792
    %v794 = vrot.slane %v766, %v793
    %v795 = vcombine.high %v773, %v773
    %v796 = vcombine.high %v780, %v780
    %v797 = vcombine.high %v787, %v787
    %v798 = vcombine.high %v794, %v794
    %v799 = vcombine.high %v747, %v747
    %v801 = vunpack.c.l.s4 1966171168
    %v802 = vunpack.c.0.s8 %v801
    %v803 = vlaneseq
    %v804 = vshrl.u32 %v803, 7
    %v805 = vsub.s32 %v802, %v804
    %v806 = vrot.slane %v747, %v805
    %v808 = vunpack.c.l.s4 1966171168
    %v809 = vunpack.c.0.s8 %v808
    %v810 = vlaneseq
    %v811 = vshrl.u32 %v810, 7
    %v812 = vsub.s32 %v809, %v811
    %v813 = vrot.slane %v799, %v812
    %v814 = vcombine.high %v806, %v806
    %v815 = vcombine.high %v813, %v813
    %v817 = vunpack.c.l.s4 1966171168
    %v818 = vunpack.c.0.s8 %v817
    %v819 = vlaneseq
    %v820 = vshrl.u32 %v819, 7
    %v821 = vsub.s32 %v818, %v820
    %v822 = vrot.slane %v806, %v821
    %v824 = vunpack.c.l.s4 1966171168
    %v825 = vunpack.c.0.s8 %v824
    %v826 = vlaneseq
    %v827 = vshrl.u32 %v826, 7
    %v828 = vsub.s32 %v825, %v827
    %v829 = vrot.slane %v813, %v828
    %v831 = vunpack.c.l.s4 1966171168
    %v832 = vunpack.c.0.s8 %v831
    %v833 = vlaneseq
    %v834 = vshrl.u32 %v833, 7
    %v835 = vsub.s32 %v832, %v834
    %v836 = vrot.slane %v814, %v835
    %v838 = vunpack.c.l.s4 1966171168
    %v839 = vunpack.c.0.s8 %v838
    %v840 = vlaneseq
    %v841 = vshrl.u32 %v840, 7
    %v842 = vsub.s32 %v839, %v841
    %v843 = vrot.slane %v815, %v842
    %v844 = vcombine.high %v822, %v822
    %v845 = vcombine.high %v829, %v829
    %v846 = vcombine.high %v836, %v836
    %v847 = vcombine.high %v843, %v843
    %v848 = vlaneseq
    %v849 = vshrl.u32 %v848, 7
    %v850 = vsub.s32 0, %v849
    %v851 = vrot.slane %v333, %v850
    %853 = vbcast.lane.b32.xlu0 %v851, 256
    %v854 = vpop.permute.xlu0 %853
    %s856 = sor.u32 256, 8
    %857 = vbcast.lane.b32.xlu0 %v851, %s856
    %v858 = vpop.permute.xlu0 %857
    %v859 = vlaneseq
    %v860 = vshrl.u32 %v859, 7
    %v861 = vsub.s32 1, %v860
    %v862 = vrot.slane %v333, %v861
    %864 = vbcast.lane.b32.xlu0 %v862, 256
    %v865 = vpop.permute.xlu0 %864
    %s867 = sor.u32 256, 8
    %868 = vbcast.lane.b32.xlu0 %v862, %s867
    %v869 = vpop.permute.xlu0 %868
    %v870 = vlaneseq
    %v871 = vshrl.u32 %v870, 7
    %v872 = vsub.s32 2, %v871
    %v873 = vrot.slane %v333, %v872
    %875 = vbcast.lane.b32.xlu0 %v873, 256
    %v876 = vpop.permute.xlu0 %875
    %s878 = sor.u32 256, 8
    %879 = vbcast.lane.b32.xlu0 %v873, %s878
    %v880 = vpop.permute.xlu0 %879
    %v881 = vlaneseq
    %v882 = vshrl.u32 %v881, 7
    %v883 = vsub.s32 3, %v882
    %v884 = vrot.slane %v333, %v883
    %886 = vbcast.lane.b32.xlu0 %v884, 256
    %v887 = vpop.permute.xlu0 %886
    %s889 = sor.u32 256, 8
    %890 = vbcast.lane.b32.xlu0 %v884, %s889
    %v891 = vpop.permute.xlu0 %890
    %v892 = vlaneseq
    %v893 = vshrl.u32 %v892, 7
    %v894 = vsub.s32 4, %v893
    %v895 = vrot.slane %v333, %v894
    %897 = vbcast.lane.b32.xlu0 %v895, 256
    %v898 = vpop.permute.xlu0 %897
    %s900 = sor.u32 256, 8
    %901 = vbcast.lane.b32.xlu0 %v895, %s900
    %v902 = vpop.permute.xlu0 %901
    %v903 = vlaneseq
    %v904 = vshrl.u32 %v903, 7
    %v905 = vsub.s32 5, %v904
    %v906 = vrot.slane %v333, %v905
    %908 = vbcast.lane.b32.xlu0 %v906, 256
    %v909 = vpop.permute.xlu0 %908
    %s911 = sor.u32 256, 8
    %912 = vbcast.lane.b32.xlu0 %v906, %s911
    %v913 = vpop.permute.xlu0 %912
    %v914 = vlaneseq
    %v915 = vshrl.u32 %v914, 7
    %v916 = vsub.s32 6, %v915
    %v917 = vrot.slane %v333, %v916
    %919 = vbcast.lane.b32.xlu0 %v917, 256
    %v920 = vpop.permute.xlu0 %919
    %s922 = sor.u32 256, 8
    %923 = vbcast.lane.b32.xlu0 %v917, %s922
    %v924 = vpop.permute.xlu0 %923
    %v925 = vlaneseq
    %v926 = vshrl.u32 %v925, 7
    %v927 = vsub.s32 7, %v926
    %v928 = vrot.slane %v333, %v927
    %930 = vbcast.lane.b32.xlu0 %v928, 256
    %v931 = vpop.permute.xlu0 %930
    %s933 = sor.u32 256, 8
    %934 = vbcast.lane.b32.xlu0 %v928, %s933
    %v935 = vpop.permute.xlu0 %934
    %v936 = vlaneseq
    %v937 = vshrl.u32 %v936, 7
    %v938 = vsub.s32 0, %v937
    %v939 = vrot.slane %v336, %v938
    %941 = vbcast.lane.b32.xlu0 %v939, 256
    %v942 = vpop.permute.xlu0 %941
    %s944 = sor.u32 256, 8
    %945 = vbcast.lane.b32.xlu0 %v939, %s944
    %v946 = vpop.permute.xlu0 %945
    %v947 = vlaneseq
    %v948 = vshrl.u32 %v947, 7
    %v949 = vsub.s32 1, %v948
    %v950 = vrot.slane %v336, %v949
    %952 = vbcast.lane.b32.xlu0 %v950, 256
    %v953 = vpop.permute.xlu0 %952
    %s955 = sor.u32 256, 8
    %956 = vbcast.lane.b32.xlu0 %v950, %s955
    %v957 = vpop.permute.xlu0 %956
    %v958 = vlaneseq
    %v959 = vshrl.u32 %v958, 7
    %v960 = vsub.s32 2, %v959
    %v961 = vrot.slane %v336, %v960
    %963 = vbcast.lane.b32.xlu0 %v961, 256
    %v964 = vpop.permute.xlu0 %963
    %s966 = sor.u32 256, 8
    %967 = vbcast.lane.b32.xlu0 %v961, %s966
    %v968 = vpop.permute.xlu0 %967
    %v969 = vlaneseq
    %v970 = vshrl.u32 %v969, 7
    %v971 = vsub.s32 3, %v970
    %v972 = vrot.slane %v336, %v971
    %974 = vbcast.lane.b32.xlu0 %v972, 256
    %v975 = vpop.permute.xlu0 %974
    %s977 = sor.u32 256, 8
    %978 = vbcast.lane.b32.xlu0 %v972, %s977
    %v979 = vpop.permute.xlu0 %978
    %v980 = vlaneseq
    %v981 = vshrl.u32 %v980, 7
    %v982 = vsub.s32 4, %v981
    %v983 = vrot.slane %v336, %v982
    %985 = vbcast.lane.b32.xlu0 %v983, 256
    %v986 = vpop.permute.xlu0 %985
    %s988 = sor.u32 256, 8
    %989 = vbcast.lane.b32.xlu0 %v983, %s988
    %v990 = vpop.permute.xlu0 %989
    %v991 = vlaneseq
    %v992 = vshrl.u32 %v991, 7
    %v993 = vsub.s32 5, %v992
    %v994 = vrot.slane %v336, %v993
    %996 = vbcast.lane.b32.xlu0 %v994, 256
    %v997 = vpop.permute.xlu0 %996
    %s999 = sor.u32 256, 8
    %1000 = vbcast.lane.b32.xlu0 %v994, %s999
    %v1001 = vpop.permute.xlu0 %1000
    %v1002 = vlaneseq
    %v1003 = vshrl.u32 %v1002, 7
    %v1004 = vsub.s32 6, %v1003
    %v1005 = vrot.slane %v336, %v1004
    %1007 = vbcast.lane.b32.xlu0 %v1005, 256
    %v1008 = vpop.permute.xlu0 %1007
    %s1010 = sor.u32 256, 8
    %1011 = vbcast.lane.b32.xlu0 %v1005, %s1010
    %v1012 = vpop.permute.xlu0 %1011
    %v1013 = vlaneseq
    %v1014 = vshrl.u32 %v1013, 7
    %v1015 = vsub.s32 7, %v1014
    %v1016 = vrot.slane %v336, %v1015
    %1018 = vbcast.lane.b32.xlu0 %v1016, 256
    %v1019 = vpop.permute.xlu0 %1018
    %s1021 = sor.u32 256, 8
    %1022 = vbcast.lane.b32.xlu0 %v1016, %s1021
    %v1023 = vpop.permute.xlu0 %1022
    %v1024 = vlaneseq
    %v1025 = vshrl.u32 %v1024, 7
    %v1026 = vsub.s32 0, %v1025
    %v1027 = vrot.slane %v773, %v1026
    %v1028 = vlaneseq
    %v1029 = vshrl.u32 %v1028, 7
    %v1030 = vsub.s32 0, %v1029
    %v1031 = vrot.slane %v787, %v1030
    %v1032 = vlaneseq
    %v1033 = vshrl.u32 %v1032, 7
    %v1034 = vsub.s32 0, %v1033
    %v1035 = vrot.slane %v795, %v1034
    %v1036 = vlaneseq
    %v1037 = vshrl.u32 %v1036, 7
    %v1038 = vsub.s32 0, %v1037
    %v1039 = vrot.slane %v797, %v1038
    %v1040 = vlaneseq
    %v1041 = vshrl.u32 %v1040, 7
    %v1042 = vsub.s32 0, %v1041
    %v1043 = vrot.slane %v780, %v1042
    %v1044 = vlaneseq
    %v1045 = vshrl.u32 %v1044, 7
    %v1046 = vsub.s32 0, %v1045
    %v1047 = vrot.slane %v794, %v1046
    %v1048 = vlaneseq
    %v1049 = vshrl.u32 %v1048, 7
    %v1050 = vsub.s32 0, %v1049
    %v1051 = vrot.slane %v796, %v1050
    %v1052 = vlaneseq
    %v1053 = vshrl.u32 %v1052, 7
    %v1054 = vsub.s32 0, %v1053
    %v1055 = vrot.slane %v798, %v1054
    %v1056 = vlaneseq
    %v1057 = vshrl.u32 %v1056, 7
    %v1058 = vsub.s32 0, %v1057
    %v1059 = vrot.slane %v822, %v1058
    %v1060 = vlaneseq
    %v1061 = vshrl.u32 %v1060, 7
    %v1062 = vsub.s32 0, %v1061
    %v1063 = vrot.slane %v836, %v1062
    %v1064 = vlaneseq
    %v1065 = vshrl.u32 %v1064, 7
    %v1066 = vsub.s32 0, %v1065
    %v1067 = vrot.slane %v844, %v1066
    %v1068 = vlaneseq
    %v1069 = vshrl.u32 %v1068, 7
    %v1070 = vsub.s32 0, %v1069
    %v1071 = vrot.slane %v846, %v1070
    %v1072 = vlaneseq
    %v1073 = vshrl.u32 %v1072, 7
    %v1074 = vsub.s32 0, %v1073
    %v1075 = vrot.slane %v829, %v1074
    %v1076 = vlaneseq
    %v1077 = vshrl.u32 %v1076, 7
    %v1078 = vsub.s32 0, %v1077
    %v1079 = vrot.slane %v843, %v1078
    %v1080 = vlaneseq
    %v1081 = vshrl.u32 %v1080, 7
    %v1082 = vsub.s32 0, %v1081
    %v1083 = vrot.slane %v845, %v1082
    %v1084 = vlaneseq
    %v1085 = vshrl.u32 %v1084, 7
    %v1086 = vsub.s32 0, %v1085
    %v1087 = vrot.slane %v847, %v1086
    %v1104 = vmul.f32 %v1027, %v854
    %v1105 = vmul.f32 %v1027, %v858
    %v1106 = vmul.f32 %v1031, %v865
    %v1107 = vmul.f32 %v1031, %v869
    %v1108 = vmul.f32 %v1035, %v876
    %v1109 = vmul.f32 %v1035, %v880
    %v1110 = vmul.f32 %v1039, %v887
    %v1111 = vmul.f32 %v1039, %v891
    %v1112 = vmul.f32 %v1043, %v898
    %v1113 = vmul.f32 %v1043, %v902
    %v1114 = vmul.f32 %v1047, %v909
    %v1115 = vmul.f32 %v1047, %v913
    %v1116 = vmul.f32 %v1051, %v920
    %v1117 = vmul.f32 %v1051, %v924
    %v1118 = vmul.f32 %v1055, %v931
    %v1119 = vmul.f32 %v1055, %v935
    %v1120 = vmul.f32 %v1059, %v942
    %v1121 = vmul.f32 %v1059, %v946
    %v1122 = vmul.f32 %v1063, %v953
    %v1123 = vmul.f32 %v1063, %v957
    %v1124 = vmul.f32 %v1067, %v964
    %v1125 = vmul.f32 %v1067, %v968
    %v1126 = vmul.f32 %v1071, %v975
    %v1127 = vmul.f32 %v1071, %v979
    %v1128 = vmul.f32 %v1075, %v986
    %v1129 = vmul.f32 %v1075, %v990
    %v1130 = vmul.f32 %v1079, %v997
    %v1131 = vmul.f32 %v1079, %v1001
    %v1132 = vmul.f32 %v1083, %v1008
    %v1133 = vmul.f32 %v1083, %v1012
    %v1134 = vmul.f32 %v1087, %v1019
    %v1135 = vmul.f32 %v1087, %v1023
    %1136 = vst.msk [vmem:[#allocation3] sm:$0xff] %vm294, %v1104
    %1137 = vst.msk [vmem:[#allocation3 + $0x8] sm:$0xff] %vm294, %v1105
    %1138 = vst.msk [vmem:[#allocation3 + $0x10] sm:$0xff] %vm294, %v1106
    %1139 = vst.msk [vmem:[#allocation3 + $0x18] sm:$0xff] %vm294, %v1107
    %1140 = vst.msk [vmem:[#allocation3 + $0x20] sm:$0xff] %vm294, %v1108
    %1141 = vst.msk [vmem:[#allocation3 + $0x28] sm:$0xff] %vm294, %v1109
    %1142 = vst.msk [vmem:[#allocation3 + $0x30] sm:$0xff] %vm294, %v1110
    %1143 = vst.msk [vmem:[#allocation3 + $0x38] sm:$0xff] %vm294, %v1111
    %1144 = vst.msk [vmem:[#allocation3 + $0x40] sm:$0xff] %vm294, %v1112
    %1145 = vst.msk [vmem:[#allocation3 + $0x48] sm:$0xff] %vm294, %v1113
    %1146 = vst.msk [vmem:[#allocation3 + $0x50] sm:$0xff] %vm294, %v1114
    %1147 = vst.msk [vmem:[#allocation3 + $0x58] sm:$0xff] %vm294, %v1115
    %1148 = vst.msk [vmem:[#allocation3 + $0x60] sm:$0xff] %vm294, %v1116
    %1149 = vst.msk [vmem:[#allocation3 + $0x68] sm:$0xff] %vm294, %v1117
    %1150 = vst.msk [vmem:[#allocation3 + $0x70] sm:$0xff] %vm294, %v1118
    %1151 = vst.msk [vmem:[#allocation3 + $0x78] sm:$0xff] %vm294, %v1119
    %1152 = vst.msk [vmem:[#allocation3 + $0x80] sm:$0xff] %vm294, %v1120
    %1153 = vst.msk [vmem:[#allocation3 + $0x88] sm:$0xff] %vm294, %v1121
    %1154 = vst.msk [vmem:[#allocation3 + $0x90] sm:$0xff] %vm294, %v1122
    %1155 = vst.msk [vmem:[#allocation3 + $0x98] sm:$0xff] %vm294, %v1123
    %1156 = vst.msk [vmem:[#allocation3 + $0xa0] sm:$0xff] %vm294, %v1124
    %1157 = vst.msk [vmem:[#allocation3 + $0xa8] sm:$0xff] %vm294, %v1125
    %1158 = vst.msk [vmem:[#allocation3 + $0xb0] sm:$0xff] %vm294, %v1126
    %1159 = vst.msk [vmem:[#allocation3 + $0xb8] sm:$0xff] %vm294, %v1127
    %1160 = vst.msk [vmem:[#allocation3 + $0xc0] sm:$0xff] %vm294, %v1128
    %1161 = vst.msk [vmem:[#allocation3 + $0xc8] sm:$0xff] %vm294, %v1129
    %1162 = vst.msk [vmem:[#allocation3 + $0xd0] sm:$0xff] %vm294, %v1130
    %1163 = vst.msk [vmem:[#allocation3 + $0xd8] sm:$0xff] %vm294, %v1131
    %1164 = vst.msk [vmem:[#allocation3 + $0xe0] sm:$0xff] %vm294, %v1132
    %1165 = vst.msk [vmem:[#allocation3 + $0xe8] sm:$0xff] %vm294, %v1133
    %1166 = vst.msk [vmem:[#allocation3 + $0xf0] sm:$0xff] %vm294, %v1134
    %1167 = vst.msk [vmem:[#allocation3 + $0xf8] sm:$0xff] %vm294, %v1135
    %v1168 = vld [vmem:[#allocation2] sm:$0xff]
    %v1169 = vld [vmem:[#allocation2 + $0x8] sm:$0xff]
    %v1170 = vmul.f32 %v1168, 0.0
    %v1171 = vmul.f32 %v1169, 0.0
    %v1172 = vld [vmem:[#allocation3] sm:$0xff]
    %v1173 = vld [vmem:[#allocation3 + $0x8] sm:$0xff]
    %v1174 = vadd.f32 %v1170, %v1172
    %v1175 = vadd.f32 %v1171, %v1173
    %1176 = vst.msk [vmem:[#allocation3] sm:$0xff] %vm294, %v1174
    %1177 = vst.msk [vmem:[#allocation3 + $0x8] sm:$0xff] %vm294, %v1175
    %s1178 = scalar_lea.vmem [#allocation2], 16
    %v1179 = vld [vmem:[%s1178] sm:$0xff]
    %v1180 = vld [vmem:[%s1178 + $0x8] sm:$0xff]
    %v1181 = vmul.f32 %v1179, %v1174
    %v1182 = vmul.f32 %v1180, %v1175
    %s1183 = scalar_lea.vmem [#allocation3], 16
    %v1184 = vld [vmem:[%s1183] sm:$0xff]
    %v1185 = vld [vmem:[%s1183 + $0x8] sm:$0xff]
    %v1186 = vadd.f32 %v1181, %v1184
    %v1187 = vadd.f32 %v1182, %v1185
    %1188 = vst.msk [vmem:[%s1183] sm:$0xff] %vm294, %v1186
    %1189 = vst.msk [vmem:[%s1183 + $0x8] sm:$0xff] %vm294, %v1187
    %s1190 = scalar_lea.vmem [#allocation2], 32
    %v1191 = vld [vmem:[%s1190] sm:$0xff]
    %v1192 = vld [vmem:[%s1190 + $0x8] sm:$0xff]
    %v1193 = vmul.f32 %v1191, %v1186
    %v1194 = vmul.f32 %v1192, %v1187
    %s1195 = scalar_lea.vmem [#allocation3], 32
    %v1196 = vld [vmem:[%s1195] sm:$0xff]
    %v1197 = vld [vmem:[%s1195 + $0x8] sm:$0xff]
    %v1198 = vadd.f32 %v1193, %v1196
    %v1199 = vadd.f32 %v1194, %v1197
    %1200 = vst.msk [vmem:[%s1195] sm:$0xff] %vm294, %v1198
    %1201 = vst.msk [vmem:[%s1195 + $0x8] sm:$0xff] %vm294, %v1199
    %s1202 = scalar_lea.vmem [#allocation2], 48
    %v1203 = vld [vmem:[%s1202] sm:$0xff]
    %v1204 = vld [vmem:[%s1202 + $0x8] sm:$0xff]
    %v1205 = vmul.f32 %v1203, %v1198
    %v1206 = vmul.f32 %v1204, %v1199
    %s1207 = scalar_lea.vmem [#allocation3], 48
    %v1208 = vld [vmem:[%s1207] sm:$0xff]
    %v1209 = vld [vmem:[%s1207 + $0x8] sm:$0xff]
    %v1210 = vadd.f32 %v1205, %v1208
    %v1211 = vadd.f32 %v1206, %v1209
    %1212 = vst.msk [vmem:[%s1207] sm:$0xff] %vm294, %v1210
    %1213 = vst.msk [vmem:[%s1207 + $0x8] sm:$0xff] %vm294, %v1211
    %s1214 = scalar_lea.vmem [#allocation2], 64
    %v1215 = vld [vmem:[%s1214] sm:$0xff]
    %v1216 = vld [vmem:[%s1214 + $0x8] sm:$0xff]
    %v1217 = vmul.f32 %v1215, %v1210
    %v1218 = vmul.f32 %v1216, %v1211
    %s1219 = scalar_lea.vmem [#allocation3], 64
    %v1220 = vld [vmem:[%s1219] sm:$0xff]
    %v1221 = vld [vmem:[%s1219 + $0x8] sm:$0xff]
    %v1222 = vadd.f32 %v1217, %v1220
    %v1223 = vadd.f32 %v1218, %v1221
    %1224 = vst.msk [vmem:[%s1219] sm:$0xff] %vm294, %v1222
    %1225 = vst.msk [vmem:[%s1219 + $0x8] sm:$0xff] %vm294, %v1223
    %s1226 = scalar_lea.vmem [#allocation2], 80
    %v1227 = vld [vmem:[%s1226] sm:$0xff]
    %v1228 = vld [vmem:[%s1226 + $0x8] sm:$0xff]
    %v1229 = vmul.f32 %v1227, %v1222
    %v1230 = vmul.f32 %v1228, %v1223
    %s1231 = scalar_lea.vmem [#allocation3], 80
    %v1232 = vld [vmem:[%s1231] sm:$0xff]
    %v1233 = vld [vmem:[%s1231 + $0x8] sm:$0xff]
    %v1234 = vadd.f32 %v1229, %v1232
    %v1235 = vadd.f32 %v1230, %v1233
    %1236 = vst.msk [vmem:[%s1231] sm:$0xff] %vm294, %v1234
    %1237 = vst.msk [vmem:[%s1231 + $0x8] sm:$0xff] %vm294, %v1235
    %s1238 = scalar_lea.vmem [#allocation2], 96
    %v1239 = vld [vmem:[%s1238] sm:$0xff]
    %v1240 = vld [vmem:[%s1238 + $0x8] sm:$0xff]
    %v1241 = vmul.f32 %v1239, %v1234
    %v1242 = vmul.f32 %v1240, %v1235
    %s1243 = scalar_lea.vmem [#allocation3], 96
    %v1244 = vld [vmem:[%s1243] sm:$0xff]
    %v1245 = vld [vmem:[%s1243 + $0x8] sm:$0xff]
    %v1246 = vadd.f32 %v1241, %v1244
    %v1247 = vadd.f32 %v1242, %v1245
    %1248 = vst.msk [vmem:[%s1243] sm:$0xff] %vm294, %v1246
    %1249 = vst.msk [vmem:[%s1243 + $0x8] sm:$0xff] %vm294, %v1247
    %s1250 = scalar_lea.vmem [#allocation2], 112
    %v1251 = vld [vmem:[%s1250] sm:$0xff]
    %v1252 = vld [vmem:[%s1250 + $0x8] sm:$0xff]
    %v1253 = vmul.f32 %v1251, %v1246
    %v1254 = vmul.f32 %v1252, %v1247
    %s1255 = scalar_lea.vmem [#allocation3], 112
    %v1256 = vld [vmem:[%s1255] sm:$0xff]
    %v1257 = vld [vmem:[%s1255 + $0x8] sm:$0xff]
    %v1258 = vadd.f32 %v1253, %v1256
    %v1259 = vadd.f32 %v1254, %v1257
    %1260 = vst.msk [vmem:[%s1255] sm:$0xff] %vm294, %v1258
    %1261 = vst.msk [vmem:[%s1255 + $0x8] sm:$0xff] %vm294, %v1259
    %s1262 = scalar_lea.vmem [#allocation2], 128
    %v1263 = vld [vmem:[%s1262] sm:$0xff]
    %v1264 = vld [vmem:[%s1262 + $0x8] sm:$0xff]
    %v1265 = vmul.f32 %v1263, 0.0
    %v1266 = vmul.f32 %v1264, 0.0
    %s1267 = scalar_lea.vmem [#allocation3], 128
    %v1268 = vld [vmem:[%s1267] sm:$0xff]
    %v1269 = vld [vmem:[%s1267 + $0x8] sm:$0xff]
    %v1270 = vadd.f32 %v1265, %v1268
    %v1271 = vadd.f32 %v1266, %v1269
    %1272 = vst.msk [vmem:[%s1267] sm:$0xff] %vm294, %v1270
    %1273 = vst.msk [vmem:[%s1267 + $0x8] sm:$0xff] %vm294, %v1271
    %s1274 = scalar_lea.vmem [#allocation2], 144
    %v1275 = vld [vmem:[%s1274] sm:$0xff]
    %v1276 = vld [vmem:[%s1274 + $0x8] sm:$0xff]
    %v1277 = vmul.f32 %v1275, %v1270
    %v1278 = vmul.f32 %v1276, %v1271
    %s1279 = scalar_lea.vmem [#allocation3], 144
    %v1280 = vld [vmem:[%s1279] sm:$0xff]
    %v1281 = vld [vmem:[%s1279 + $0x8] sm:$0xff]
    %v1282 = vadd.f32 %v1277, %v1280
    %v1283 = vadd.f32 %v1278, %v1281
    %1284 = vst.msk [vmem:[%s1279] sm:$0xff] %vm294, %v1282
    %1285 = vst.msk [vmem:[%s1279 + $0x8] sm:$0xff] %vm294, %v1283
    %s1286 = scalar_lea.vmem [#allocation2], 160
    %v1287 = vld [vmem:[%s1286] sm:$0xff]
    %v1288 = vld [vmem:[%s1286 + $0x8] sm:$0xff]
    %v1289 = vmul.f32 %v1287, %v1282
    %v1290 = vmul.f32 %v1288, %v1283
    %s1291 = scalar_lea.vmem [#allocation3], 160
    %v1292 = vld [vmem:[%s1291] sm:$0xff]
    %v1293 = vld [vmem:[%s1291 + $0x8] sm:$0xff]
    %v1294 = vadd.f32 %v1289, %v1292
    %v1295 = vadd.f32 %v1290, %v1293
    %1296 = vst.msk [vmem:[%s1291] sm:$0xff] %vm294, %v1294
    %1297 = vst.msk [vmem:[%s1291 + $0x8] sm:$0xff] %vm294, %v1295
    %s1298 = scalar_lea.vmem [#allocation2], 176
    %v1299 = vld [vmem:[%s1298] sm:$0xff]
    %v1300 = vld [vmem:[%s1298 + $0x8] sm:$0xff]
    %v1301 = vmul.f32 %v1299, %v1294
    %v1302 = vmul.f32 %v1300, %v1295
    %s1303 = scalar_lea.vmem [#allocation3], 176
    %v1304 = vld [vmem:[%s1303] sm:$0xff]
    %v1305 = vld [vmem:[%s1303 + $0x8] sm:$0xff]
    %v1306 = vadd.f32 %v1301, %v1304
    %v1307 = vadd.f32 %v1302, %v1305
    %1308 = vst.msk [vmem:[%s1303] sm:$0xff] %vm294, %v1306
    %1309 = vst.msk [vmem:[%s1303 + $0x8] sm:$0xff] %vm294, %v1307
    %s1310 = scalar_lea.vmem [#allocation2], 192
    %v1311 = vld [vmem:[%s1310] sm:$0xff]
    %v1312 = vld [vmem:[%s1310 + $0x8] sm:$0xff]
    %v1313 = vmul.f32 %v1311, %v1306
    %v1314 = vmul.f32 %v1312, %v1307
    %s1315 = scalar_lea.vmem [#allocation3], 192
    %v1316 = vld [vmem:[%s1315] sm:$0xff]
    %v1317 = vld [vmem:[%s1315 + $0x8] sm:$0xff]
    %v1318 = vadd.f32 %v1313, %v1316
    %v1319 = vadd.f32 %v1314, %v1317
    %1320 = vst.msk [vmem:[%s1315] sm:$0xff] %vm294, %v1318
    %1321 = vst.msk [vmem:[%s1315 + $0x8] sm:$0xff] %vm294, %v1319
    %s1322 = scalar_lea.vmem [#allocation2], 208
    %v1323 = vld [vmem:[%s1322] sm:$0xff]
    %v1324 = vld [vmem:[%s1322 + $0x8] sm:$0xff]
    %v1325 = vmul.f32 %v1323, %v1318
    %v1326 = vmul.f32 %v1324, %v1319
    %s1327 = scalar_lea.vmem [#allocation3], 208
    %v1328 = vld [vmem:[%s1327] sm:$0xff]
    %v1329 = vld [vmem:[%s1327 + $0x8] sm:$0xff]
    %v1330 = vadd.f32 %v1325, %v1328
    %v1331 = vadd.f32 %v1326, %v1329
    %1332 = vst.msk [vmem:[%s1327] sm:$0xff] %vm294, %v1330
    %1333 = vst.msk [vmem:[%s1327 + $0x8] sm:$0xff] %vm294, %v1331
    %s1334 = scalar_lea.vmem [#allocation2], 224
    %v1335 = vld [vmem:[%s1334] sm:$0xff]
    %v1336 = vld [vmem:[%s1334 + $0x8] sm:$0xff]
    %v1337 = vmul.f32 %v1335, %v1330
    %v1338 = vmul.f32 %v1336, %v1331
    %s1339 = scalar_lea.vmem [#allocation3], 224
    %v1340 = vld [vmem:[%s1339] sm:$0xff]
    %v1341 = vld [vmem:[%s1339 + $0x8] sm:$0xff]
    %v1342 = vadd.f32 %v1337, %v1340
    %v1343 = vadd.f32 %v1338, %v1341
    %1344 = vst.msk [vmem:[%s1339] sm:$0xff] %vm294, %v1342
    %1345 = vst.msk [vmem:[%s1339 + $0x8] sm:$0xff] %vm294, %v1343
    %s1346 = scalar_lea.vmem [#allocation2], 240
    %v1347 = vld [vmem:[%s1346] sm:$0xff]
    %v1348 = vld [vmem:[%s1346 + $0x8] sm:$0xff]
    %v1349 = vmul.f32 %v1347, %v1342
    %v1350 = vmul.f32 %v1348, %v1343
    %s1351 = scalar_lea.vmem [#allocation3], 240
    %v1352 = vld [vmem:[%s1351] sm:$0xff]
    %v1353 = vld [vmem:[%s1351 + $0x8] sm:$0xff]
    %v1354 = vadd.f32 %v1349, %v1352
    %v1355 = vadd.f32 %v1350, %v1353
    %1356 = vst.msk [vmem:[%s1351] sm:$0xff] %vm294, %v1354
    %1357 = vst.msk [vmem:[%s1351 + $0x8] sm:$0xff] %vm294, %v1355
    %v1358 = vld [vmem:[#allocation3] sm:$0xff]
    %v1359 = vld [vmem:[#allocation3 + $0x8] sm:$0xff]
    %v1360 = vld [vmem:[#allocation3 + $0x10] sm:$0xff]
    %v1361 = vld [vmem:[#allocation3 + $0x18] sm:$0xff]
    %v1362 = vld [vmem:[#allocation3 + $0x20] sm:$0xff]
    %v1363 = vld [vmem:[#allocation3 + $0x28] sm:$0xff]
    %v1364 = vld [vmem:[#allocation3 + $0x30] sm:$0xff]
    %v1365 = vld [vmem:[#allocation3 + $0x38] sm:$0xff]
    %v1366 = vld [vmem:[#allocation3 + $0x40] sm:$0xff]
    %v1367 = vld [vmem:[#allocation3 + $0x48] sm:$0xff]
    %v1368 = vld [vmem:[#allocation3 + $0x50] sm:$0xff]
    %v1369 = vld [vmem:[#allocation3 + $0x58] sm:$0xff]
    %v1370 = vld [vmem:[#allocation3 + $0x60] sm:$0xff]
    %v1371 = vld [vmem:[#allocation3 + $0x68] sm:$0xff]
    %v1372 = vld [vmem:[#allocation3 + $0x70] sm:$0xff]
    %v1373 = vld [vmem:[#allocation3 + $0x78] sm:$0xff]
    %v1374 = vld [vmem:[#allocation3 + $0x80] sm:$0xff]
    %v1375 = vld [vmem:[#allocation3 + $0x88] sm:$0xff]
    %v1376 = vld [vmem:[#allocation3 + $0x90] sm:$0xff]
    %v1377 = vld [vmem:[#allocation3 + $0x98] sm:$0xff]
    %v1378 = vld [vmem:[#allocation3 + $0xa0] sm:$0xff]
    %v1379 = vld [vmem:[#allocation3 + $0xa8] sm:$0xff]
    %v1380 = vld [vmem:[#allocation3 + $0xb0] sm:$0xff]
    %v1381 = vld [vmem:[#allocation3 + $0xb8] sm:$0xff]
    %v1382 = vld [vmem:[#allocation3 + $0xc0] sm:$0xff]
    %v1383 = vld [vmem:[#allocation3 + $0xc8] sm:$0xff]
    %v1384 = vld [vmem:[#allocation3 + $0xd0] sm:$0xff]
    %v1385 = vld [vmem:[#allocation3 + $0xd8] sm:$0xff]
    %v1386 = vld [vmem:[#allocation3 + $0xe0] sm:$0xff]
    %v1387 = vld [vmem:[#allocation3 + $0xe8] sm:$0xff]
    %v1388 = vld [vmem:[#allocation3 + $0xf0] sm:$0xff]
    %v1389 = vld [vmem:[#allocation3 + $0xf8] sm:$0xff]
    %s1391 = sor.u32 256, 16
    %1392 = vbcast.lane.b32.xlu0 %v851, %s1391
    %v1393 = vpop.permute.xlu0 %1392
    %s1395 = sor.u32 256, 24
    %1396 = vbcast.lane.b32.xlu0 %v851, %s1395
    %v1397 = vpop.permute.xlu0 %1396
    %s1399 = sor.u32 256, 16
    %1400 = vbcast.lane.b32.xlu0 %v862, %s1399
    %v1401 = vpop.permute.xlu0 %1400
    %s1403 = sor.u32 256, 24
    %1404 = vbcast.lane.b32.xlu0 %v862, %s1403
    %v1405 = vpop.permute.xlu0 %1404
    %s1407 = sor.u32 256, 16
    %1408 = vbcast.lane.b32.xlu0 %v873, %s1407
    %v1409 = vpop.permute.xlu0 %1408
    %s1411 = sor.u32 256, 24
    %1412 = vbcast.lane.b32.xlu0 %v873, %s1411
    %v1413 = vpop.permute.xlu0 %1412
    %s1415 = sor.u32 256, 16
    %1416 = vbcast.lane.b32.xlu0 %v884, %s1415
    %v1417 = vpop.permute.xlu0 %1416
    %s1419 = sor.u32 256, 24
    %1420 = vbcast.lane.b32.xlu0 %v884, %s1419
    %v1421 = vpop.permute.xlu0 %1420
    %s1423 = sor.u32 256, 16
    %1424 = vbcast.lane.b32.xlu0 %v895, %s1423
    %v1425 = vpop.permute.xlu0 %1424
    %s1427 = sor.u32 256, 24
    %1428 = vbcast.lane.b32.xlu0 %v895, %s1427
    %v1429 = vpop.permute.xlu0 %1428
    %s1431 = sor.u32 256, 16
    %1432 = vbcast.lane.b32.xlu0 %v906, %s1431
    %v1433 = vpop.permute.xlu0 %1432
    %s1435 = sor.u32 256, 24
    %1436 = vbcast.lane.b32.xlu0 %v906, %s1435
    %v1437 = vpop.permute.xlu0 %1436
    %s1439 = sor.u32 256, 16
    %1440 = vbcast.lane.b32.xlu0 %v917, %s1439
    %v1441 = vpop.permute.xlu0 %1440
    %s1443 = sor.u32 256, 24
    %1444 = vbcast.lane.b32.xlu0 %v917, %s1443
    %v1445 = vpop.permute.xlu0 %1444
    %s1447 = sor.u32 256, 16
    %1448 = vbcast.lane.b32.xlu0 %v928, %s1447
    %v1449 = vpop.permute.xlu0 %1448
    %s1451 = sor.u32 256, 24
    %1452 = vbcast.lane.b32.xlu0 %v928, %s1451
    %v1453 = vpop.permute.xlu0 %1452
    %s1455 = sor.u32 256, 16
    %1456 = vbcast.lane.b32.xlu0 %v939, %s1455
    %v1457 = vpop.permute.xlu0 %1456
    %s1459 = sor.u32 256, 24
    %1460 = vbcast.lane.b32.xlu0 %v939, %s1459
    %v1461 = vpop.permute.xlu0 %1460
    %s1463 = sor.u32 256, 16
    %1464 = vbcast.lane.b32.xlu0 %v950, %s1463
    %v1465 = vpop.permute.xlu0 %1464
    %s1467 = sor.u32 256, 24
    %1468 = vbcast.lane.b32.xlu0 %v950, %s1467
    %v1469 = vpop.permute.xlu0 %1468
    %s1471 = sor.u32 256, 16
    %1472 = vbcast.lane.b32.xlu0 %v961, %s1471
    %v1473 = vpop.permute.xlu0 %1472
    %s1475 = sor.u32 256, 24
    %1476 = vbcast.lane.b32.xlu0 %v961, %s1475
    %v1477 = vpop.permute.xlu0 %1476
    %s1479 = sor.u32 256, 16
    %1480 = vbcast.lane.b32.xlu0 %v972, %s1479
    %v1481 = vpop.permute.xlu0 %1480
    %s1483 = sor.u32 256, 24
    %1484 = vbcast.lane.b32.xlu0 %v972, %s1483
    %v1485 = vpop.permute.xlu0 %1484
    %s1487 = sor.u32 256, 16
    %1488 = vbcast.lane.b32.xlu0 %v983, %s1487
    %v1489 = vpop.permute.xlu0 %1488
    %s1491 = sor.u32 256, 24
    %1492 = vbcast.lane.b32.xlu0 %v983, %s1491
    %v1493 = vpop.permute.xlu0 %1492
    %s1495 = sor.u32 256, 16
    %1496 = vbcast.lane.b32.xlu0 %v994, %s1495
    %v1497 = vpop.permute.xlu0 %1496
    %s1499 = sor.u32 256, 24
    %1500 = vbcast.lane.b32.xlu0 %v994, %s1499
    %v1501 = vpop.permute.xlu0 %1500
    %s1503 = sor.u32 256, 16
    %1504 = vbcast.lane.b32.xlu0 %v1005, %s1503
    %v1505 = vpop.permute.xlu0 %1504
    %s1507 = sor.u32 256, 24
    %1508 = vbcast.lane.b32.xlu0 %v1005, %s1507
    %v1509 = vpop.permute.xlu0 %1508
    %s1511 = sor.u32 256, 16
    %1512 = vbcast.lane.b32.xlu0 %v1016, %s1511
    %v1513 = vpop.permute.xlu0 %1512
    %s1515 = sor.u32 256, 24
    %1516 = vbcast.lane.b32.xlu0 %v1016, %s1515
    %v1517 = vpop.permute.xlu0 %1516
    %v1518 = vmul.f32 %v1358, %v1393
    %v1519 = vmul.f32 %v1359, %v1397
    %v1520 = vmul.f32 %v1360, %v1401
    %v1521 = vmul.f32 %v1361, %v1405
    %v1522 = vmul.f32 %v1362, %v1409
    %v1523 = vmul.f32 %v1363, %v1413
    %v1524 = vmul.f32 %v1364, %v1417
    %v1525 = vmul.f32 %v1365, %v1421
    %v1526 = vmul.f32 %v1366, %v1425
    %v1527 = vmul.f32 %v1367, %v1429
    %v1528 = vmul.f32 %v1368, %v1433
    %v1529 = vmul.f32 %v1369, %v1437
    %v1530 = vmul.f32 %v1370, %v1441
    %v1531 = vmul.f32 %v1371, %v1445
    %v1532 = vmul.f32 %v1372, %v1449
    %v1533 = vmul.f32 %v1373, %v1453
    %v1534 = vmul.f32 %v1374, %v1457
    %v1535 = vmul.f32 %v1375, %v1461
    %v1536 = vmul.f32 %v1376, %v1465
    %v1537 = vmul.f32 %v1377, %v1469
    %v1538 = vmul.f32 %v1378, %v1473
    %v1539 = vmul.f32 %v1379, %v1477
    %v1540 = vmul.f32 %v1380, %v1481
    %v1541 = vmul.f32 %v1381, %v1485
    %v1542 = vmul.f32 %v1382, %v1489
    %v1543 = vmul.f32 %v1383, %v1493
    %v1544 = vmul.f32 %v1384, %v1497
    %v1545 = vmul.f32 %v1385, %v1501
    %v1546 = vmul.f32 %v1386, %v1505
    %v1547 = vmul.f32 %v1387, %v1509
    %v1548 = vmul.f32 %v1388, %v1513
    %v1549 = vmul.f32 %v1389, %v1517
    %v1550 = vsel %vm294, %v1518, 0.0
    %v1551 = vsel %vm294, %v1519, 0.0
    %v1552 = vadd.f32 %v1550, %v1551
    %v1553 = vrot.slane %v1552, 4
    %v1554 = vadd.f32 %v1552, %v1553
    %v1555 = vrot.slane %v1554, 2
    %v1556 = vadd.f32 %v1554, %v1555
    %v1557 = vrot.slane %v1556, 1
    %v1558 = vadd.f32 %v1556, %v1557
    %v1559 = vsel %vm294, %v1520, 0.0
    %v1560 = vsel %vm294, %v1521, 0.0
    %v1561 = vadd.f32 %v1559, %v1560
    %v1562 = vrot.slane %v1561, 4
    %v1563 = vadd.f32 %v1561, %v1562
    %v1564 = vrot.slane %v1563, 2
    %v1565 = vadd.f32 %v1563, %v1564
    %v1566 = vrot.slane %v1565, 1
    %v1567 = vadd.f32 %v1565, %v1566
    %v1568 = vsel %vm294, %v1522, 0.0
    %v1569 = vsel %vm294, %v1523, 0.0
    %v1570 = vadd.f32 %v1568, %v1569
    %v1571 = vrot.slane %v1570, 4
    %v1572 = vadd.f32 %v1570, %v1571
    %v1573 = vrot.slane %v1572, 2
    %v1574 = vadd.f32 %v1572, %v1573
    %v1575 = vrot.slane %v1574, 1
    %v1576 = vadd.f32 %v1574, %v1575
    %v1577 = vsel %vm294, %v1524, 0.0
    %v1578 = vsel %vm294, %v1525, 0.0
    %v1579 = vadd.f32 %v1577, %v1578
    %v1580 = vrot.slane %v1579, 4
    %v1581 = vadd.f32 %v1579, %v1580
    %v1582 = vrot.slane %v1581, 2
    %v1583 = vadd.f32 %v1581, %v1582
    %v1584 = vrot.slane %v1583, 1
    %v1585 = vadd.f32 %v1583, %v1584
    %v1586 = vsel %vm294, %v1526, 0.0
    %v1587 = vsel %vm294, %v1527, 0.0
    %v1588 = vadd.f32 %v1586, %v1587
    %v1589 = vrot.slane %v1588, 4
    %v1590 = vadd.f32 %v1588, %v1589
    %v1591 = vrot.slane %v1590, 2
    %v1592 = vadd.f32 %v1590, %v1591
    %v1593 = vrot.slane %v1592, 1
    %v1594 = vadd.f32 %v1592, %v1593
    %v1595 = vsel %vm294, %v1528, 0.0
    %v1596 = vsel %vm294, %v1529, 0.0
    %v1597 = vadd.f32 %v1595, %v1596
    %v1598 = vrot.slane %v1597, 4
    %v1599 = vadd.f32 %v1597, %v1598
    %v1600 = vrot.slane %v1599, 2
    %v1601 = vadd.f32 %v1599, %v1600
    %v1602 = vrot.slane %v1601, 1
    %v1603 = vadd.f32 %v1601, %v1602
    %v1604 = vsel %vm294, %v1530, 0.0
    %v1605 = vsel %vm294, %v1531, 0.0
    %v1606 = vadd.f32 %v1604, %v1605
    %v1607 = vrot.slane %v1606, 4
    %v1608 = vadd.f32 %v1606, %v1607
    %v1609 = vrot.slane %v1608, 2
    %v1610 = vadd.f32 %v1608, %v1609
    %v1611 = vrot.slane %v1610, 1
    %v1612 = vadd.f32 %v1610, %v1611
    %v1613 = vsel %vm294, %v1532, 0.0
    %v1614 = vsel %vm294, %v1533, 0.0
    %v1615 = vadd.f32 %v1613, %v1614
    %v1616 = vrot.slane %v1615, 4
    %v1617 = vadd.f32 %v1615, %v1616
    %v1618 = vrot.slane %v1617, 2
    %v1619 = vadd.f32 %v1617, %v1618
    %v1620 = vrot.slane %v1619, 1
    %v1621 = vadd.f32 %v1619, %v1620
    %v1622 = vsel %vm294, %v1534, 0.0
    %v1623 = vsel %vm294, %v1535, 0.0
    %v1624 = vadd.f32 %v1622, %v1623
    %v1625 = vrot.slane %v1624, 4
    %v1626 = vadd.f32 %v1624, %v1625
    %v1627 = vrot.slane %v1626, 2
    %v1628 = vadd.f32 %v1626, %v1627
    %v1629 = vrot.slane %v1628, 1
    %v1630 = vadd.f32 %v1628, %v1629
    %v1631 = vsel %vm294, %v1536, 0.0
    %v1632 = vsel %vm294, %v1537, 0.0
    %v1633 = vadd.f32 %v1631, %v1632
    %v1634 = vrot.slane %v1633, 4
    %v1635 = vadd.f32 %v1633, %v1634
    %v1636 = vrot.slane %v1635, 2
    %v1637 = vadd.f32 %v1635, %v1636
    %v1638 = vrot.slane %v1637, 1
    %v1639 = vadd.f32 %v1637, %v1638
    %v1640 = vsel %vm294, %v1538, 0.0
    %v1641 = vsel %vm294, %v1539, 0.0
    %v1642 = vadd.f32 %v1640, %v1641
    %v1643 = vrot.slane %v1642, 4
    %v1644 = vadd.f32 %v1642, %v1643
    %v1645 = vrot.slane %v1644, 2
    %v1646 = vadd.f32 %v1644, %v1645
    %v1647 = vrot.slane %v1646, 1
    %v1648 = vadd.f32 %v1646, %v1647
    %v1649 = vsel %vm294, %v1540, 0.0
    %v1650 = vsel %vm294, %v1541, 0.0
    %v1651 = vadd.f32 %v1649, %v1650
    %v1652 = vrot.slane %v1651, 4
    %v1653 = vadd.f32 %v1651, %v1652
    %v1654 = vrot.slane %v1653, 2
    %v1655 = vadd.f32 %v1653, %v1654
    %v1656 = vrot.slane %v1655, 1
    %v1657 = vadd.f32 %v1655, %v1656
    %v1658 = vsel %vm294, %v1542, 0.0
    %v1659 = vsel %vm294, %v1543, 0.0
    %v1660 = vadd.f32 %v1658, %v1659
    %v1661 = vrot.slane %v1660, 4
    %v1662 = vadd.f32 %v1660, %v1661
    %v1663 = vrot.slane %v1662, 2
    %v1664 = vadd.f32 %v1662, %v1663
    %v1665 = vrot.slane %v1664, 1
    %v1666 = vadd.f32 %v1664, %v1665
    %v1667 = vsel %vm294, %v1544, 0.0
    %v1668 = vsel %vm294, %v1545, 0.0
    %v1669 = vadd.f32 %v1667, %v1668
    %v1670 = vrot.slane %v1669, 4
    %v1671 = vadd.f32 %v1669, %v1670
    %v1672 = vrot.slane %v1671, 2
    %v1673 = vadd.f32 %v1671, %v1672
    %v1674 = vrot.slane %v1673, 1
    %v1675 = vadd.f32 %v1673, %v1674
    %v1676 = vsel %vm294, %v1546, 0.0
    %v1677 = vsel %vm294, %v1547, 0.0
    %v1678 = vadd.f32 %v1676, %v1677
    %v1679 = vrot.slane %v1678, 4
    %v1680 = vadd.f32 %v1678, %v1679
    %v1681 = vrot.slane %v1680, 2
    %v1682 = vadd.f32 %v1680, %v1681
    %v1683 = vrot.slane %v1682, 1
    %v1684 = vadd.f32 %v1682, %v1683
    %v1685 = vsel %vm294, %v1548, 0.0
    %v1686 = vsel %vm294, %v1549, 0.0
    %v1687 = vadd.f32 %v1685, %v1686
    %v1688 = vrot.slane %v1687, 4
    %v1689 = vadd.f32 %v1687, %v1688
    %v1690 = vrot.slane %v1689, 2
    %v1691 = vadd.f32 %v1689, %v1690
    %v1692 = vrot.slane %v1691, 1
    %v1693 = vadd.f32 %v1691, %v1692
    %v1694 = vld [vmem:[%s10] sm:$0x1]
    %v1696 = vlaneseq
    %v1697 = vshrl.u32 %v1696, 7
    %v1698 = vsub.s32 0, %v1697
    %v1699 = vrot.slane %v1694, %v1698
    %v1701 = vmul.f32 %v259, %v1699
    %v1702 = vmul.f32 %v260, %v1699
    %v1705 = vrot.slane %v1701, 1
    %v1706 = vrot.slane %v1701, 2
    %v1707 = vrot.slane %v1701, 3
    %v1708 = vrot.slane %v1701, 4
    %v1709 = vrot.slane %v1701, 5
    %v1710 = vrot.slane %v1701, 6
    %v1711 = vrot.slane %v1701, 7
    %v1712 = vrot.slane %v1702, 1
    %v1713 = vrot.slane %v1702, 2
    %v1714 = vrot.slane %v1702, 3
    %v1715 = vrot.slane %v1702, 4
    %v1716 = vrot.slane %v1702, 5
    %v1717 = vrot.slane %v1702, 6
    %v1718 = vrot.slane %v1702, 7
    %v1735 = vadd.f32 %v1558, %v1701
    %v1736 = vadd.f32 %v1567, %v1705
    %v1737 = vadd.f32 %v1576, %v1706
    %v1738 = vadd.f32 %v1585, %v1707
    %v1739 = vadd.f32 %v1594, %v1708
    %v1740 = vadd.f32 %v1603, %v1709
    %v1741 = vadd.f32 %v1612, %v1710
    %v1742 = vadd.f32 %v1621, %v1711
    %v1743 = vadd.f32 %v1630, %v1702
    %v1744 = vadd.f32 %v1639, %v1712
    %v1745 = vadd.f32 %v1648, %v1713
    %v1746 = vadd.f32 %v1657, %v1714
    %v1747 = vadd.f32 %v1666, %v1715
    %v1748 = vadd.f32 %v1675, %v1716
    %v1749 = vadd.f32 %v1684, %v1717
    %v1750 = vadd.f32 %v1693, %v1718
    %v1751 = vxor.u32 %v134, 2147483648
    %v1752 = vxor.u32 %v137, 2147483648
    %v1753 = vmul.f32 %v1751, 1.442695
    %v1754 = vpow.pop %v1753
    %v1755 = vmul.f32 %v1752, 1.442695
    %v1756 = vpow.pop %v1755
    %v1757 = vadd.f32 %v1754, 1.0
    %v1758 = vadd.f32 %v1756, 1.0
    %v1759 = vrcp.pop %v1757
    %v1760 = vmul.f32 1.0, %v1759
    %v1761 = vrcp.pop %v1758
    %v1762 = vmul.f32 1.0, %v1761
    %v1763 = vmul.f32 %v134, %v1760
    %v1764 = vmul.f32 %v137, %v1762
    %v1767 = vrot.slane %v1763, 1
    %v1768 = vrot.slane %v1763, 2
    %v1769 = vrot.slane %v1763, 3
    %v1770 = vrot.slane %v1763, 4
    %v1771 = vrot.slane %v1763, 5
    %v1772 = vrot.slane %v1763, 6
    %v1773 = vrot.slane %v1763, 7
    %v1774 = vrot.slane %v1764, 1
    %v1775 = vrot.slane %v1764, 2
    %v1776 = vrot.slane %v1764, 3
    %v1777 = vrot.slane %v1764, 4
    %v1778 = vrot.slane %v1764, 5
    %v1779 = vrot.slane %v1764, 6
    %v1780 = vrot.slane %v1764, 7
    %1781 = vrot.lane.b32.xlu0 %v1763, 64
    %v1782 = vpop.permute.xlu0 %1781
    %1783 = vrot.lane.b32.xlu0 %v1767, 64
    %v1784 = vpop.permute.xlu0 %1783
    %1785 = vrot.lane.b32.xlu0 %v1768, 64
    %v1786 = vpop.permute.xlu0 %1785
    %1787 = vrot.lane.b32.xlu0 %v1769, 64
    %v1788 = vpop.permute.xlu0 %1787
    %1789 = vrot.lane.b32.xlu0 %v1770, 64
    %v1790 = vpop.permute.xlu0 %1789
    %1791 = vrot.lane.b32.xlu0 %v1771, 64
    %v1792 = vpop.permute.xlu0 %1791
    %1793 = vrot.lane.b32.xlu0 %v1772, 64
    %v1794 = vpop.permute.xlu0 %1793
    %1795 = vrot.lane.b32.xlu0 %v1773, 64
    %v1796 = vpop.permute.xlu0 %1795
    %1797 = vrot.lane.b32.xlu0 %v1764, 64
    %v1798 = vpop.permute.xlu0 %1797
    %1799 = vrot.lane.b32.xlu0 %v1774, 64
    %v1800 = vpop.permute.xlu0 %1799
    %1801 = vrot.lane.b32.xlu0 %v1775, 64
    %v1802 = vpop.permute.xlu0 %1801
    %1803 = vrot.lane.b32.xlu0 %v1776, 64
    %v1804 = vpop.permute.xlu0 %1803
    %1805 = vrot.lane.b32.xlu0 %v1777, 64
    %v1806 = vpop.permute.xlu0 %1805
    %1807 = vrot.lane.b32.xlu0 %v1778, 64
    %v1808 = vpop.permute.xlu0 %1807
    %1809 = vrot.lane.b32.xlu0 %v1779, 64
    %v1810 = vpop.permute.xlu0 %1809
    %1811 = vrot.lane.b32.xlu0 %v1780, 64
    %v1812 = vpop.permute.xlu0 %1811
    %v1829 = vmul.f32 %v1735, %v1782
    %v1830 = vmul.f32 %v1736, %v1784
    %v1831 = vmul.f32 %v1737, %v1786
    %v1832 = vmul.f32 %v1738, %v1788
    %v1833 = vmul.f32 %v1739, %v1790
    %v1834 = vmul.f32 %v1740, %v1792
    %v1835 = vmul.f32 %v1741, %v1794
    %v1836 = vmul.f32 %v1742, %v1796
    %v1837 = vmul.f32 %v1743, %v1798
    %v1838 = vmul.f32 %v1744, %v1800
    %v1839 = vmul.f32 %v1745, %v1802
    %v1840 = vmul.f32 %v1746, %v1804
    %v1841 = vmul.f32 %v1747, %v1806
    %v1842 = vmul.f32 %v1748, %v1808
    %v1843 = vmul.f32 %v1749, %v1810
    %v1844 = vmul.f32 %v1750, %v1812
    %v1845 = vpack.c.bf16 %v1829, %v1829
    %v1846 = vpack.c.bf16 %v1830, %v1830
    %v1847 = vpack.c.bf16 %v1831, %v1831
    %v1848 = vpack.c.bf16 %v1832, %v1832
    %v1849 = vpack.c.bf16 %v1833, %v1833
    %v1850 = vpack.c.bf16 %v1834, %v1834
    %v1851 = vpack.c.bf16 %v1835, %v1835
    %v1852 = vpack.c.bf16 %v1836, %v1836
    %v1853 = vpack.c.bf16 %v1837, %v1837
    %v1854 = vpack.c.bf16 %v1838, %v1838
    %v1855 = vpack.c.bf16 %v1839, %v1839
    %v1856 = vpack.c.bf16 %v1840, %v1840
    %v1857 = vpack.c.bf16 %v1841, %v1841
    %v1858 = vpack.c.bf16 %v1842, %v1842
    %v1859 = vpack.c.bf16 %v1843, %v1843
    %v1860 = vpack.c.bf16 %v1844, %v1844
    %v1861 = vld [vmem:[%s11] sm:$0xf]
    %v1862 = vld [vmem:[%s11 + $0x4] sm:$0xf]
    %v1863 = vld [vmem:[%s11 + $0x8] sm:$0xf]
    %v1864 = vld [vmem:[%s11 + $0xc] sm:$0xf]
    %v1865 = vld [vmem:[%s11 + $0x10] sm:$0xf]
    %v1866 = vld [vmem:[%s11 + $0x14] sm:$0xf]
    %v1867 = vld [vmem:[%s11 + $0x18] sm:$0xf]
    %v1868 = vld [vmem:[%s11 + $0x1c] sm:$0xf]
    %v1885 = vunpack.c.l.b16 %v1845
    %v1886 = vunpack.c.l.b16 %v1846
    %v1887 = vunpack.c.l.b16 %v1847
    %v1888 = vunpack.c.l.b16 %v1848
    %v1889 = vunpack.c.l.b16 %v1849
    %v1890 = vunpack.c.l.b16 %v1850
    %v1891 = vunpack.c.l.b16 %v1851
    %v1892 = vunpack.c.l.b16 %v1852
    %v1893 = vunpack.c.l.b16 %v1853
    %v1894 = vunpack.c.l.b16 %v1854
    %v1895 = vunpack.c.l.b16 %v1855
    %v1896 = vunpack.c.l.b16 %v1856
    %v1897 = vunpack.c.l.b16 %v1857
    %v1898 = vunpack.c.l.b16 %v1858
    %v1899 = vunpack.c.l.b16 %v1859
    %v1900 = vunpack.c.l.b16 %v1860
    %v1901 = vrot.slane %v1886, 7
    %vm1902 = vcmask 1041409
    %v1903 = vsel %vm1902, %v1901, %v1885
    %v1904 = vrot.slane %v1887, 6
    %vm1905 = vcmask 1042434
    %v1906 = vsel %vm1905, %v1904, %v1903
    %v1907 = vrot.slane %v1888, 5
    %vm1908 = vcmask 1043459
    %v1909 = vsel %vm1908, %v1907, %v1906
    %v1910 = vrot.slane %v1889, 4
    %vm1911 = vcmask 1044484
    %v1912 = vsel %vm1911, %v1910, %v1909
    %v1913 = vrot.slane %v1890, 3
    %vm1914 = vcmask 1045509
    %v1915 = vsel %vm1914, %v1913, %v1912
    %v1916 = vrot.slane %v1891, 2
    %vm1917 = vcmask 1046534
    %v1918 = vsel %vm1917, %v1916, %v1915
    %v1919 = vrot.slane %v1892, 1
    %vm1920 = vcmask 1047559
    %v1921 = vsel %vm1920, %v1919, %v1918
    %v1922 = vrot.slane %v1894, 7
    %v1923 = vsel %vm1902, %v1922, %v1893
    %v1924 = vrot.slane %v1895, 6
    %v1925 = vsel %vm1905, %v1924, %v1923
    %v1926 = vrot.slane %v1896, 5
    %v1927 = vsel %vm1908, %v1926, %v1925
    %v1928 = vrot.slane %v1897, 4
    %v1929 = vsel %vm1911, %v1928, %v1927
    %v1930 = vrot.slane %v1898, 3
    %v1931 = vsel %vm1914, %v1930, %v1929
    %v1932 = vrot.slane %v1899, 2
    %v1933 = vsel %vm1917, %v1932, %v1931
    %v1934 = vrot.slane %v1900, 1
    %v1935 = vsel %vm1920, %v1934, %v1933
    %v1936 = vpack.c.b16 %v1935, %v1921
    %v1945 = vunpack.c.l.b16 %v1861
    %v1946 = vunpack.c.l.b16 %v1862
    %v1947 = vunpack.c.l.b16 %v1863
    %v1948 = vunpack.c.l.b16 %v1864
    %v1949 = vunpack.c.l.b16 %v1865
    %v1950 = vunpack.c.l.b16 %v1866
    %v1951 = vunpack.c.l.b16 %v1867
    %v1952 = vunpack.c.l.b16 %v1868
    %v1953 = vpack.c.b16 %v1946, %v1945
    %v1954 = vpack.c.b16 %v1948, %v1947
    %v1955 = vpack.c.b16 %v1950, %v1949
    %v1956 = vpack.c.b16 %v1952, %v1951
    %v1962 = vsel %vm294, %v1936, 0
    %1964 = vmatprep.subr.bf16.mxu0 0
    %1965 = vmatpush1.bf16.msra.mxu0 %v1953
    %1966 = vmatprep.subr.bf16.mxu0 0
    %1967 = vmatpush1.bf16.msra.mxu0 %v1954
    %1968 = vmatprep.subr.bf16.mxu0 0
    %1969 = vmatpush1.bf16.msra.mxu0 %v1955
    %1970 = vmatprep.subr.bf16.mxu0 0
    %1971 = vmatpush1.bf16.msra.mxu0 %v1956
    %1972 = vmatprep.subr.bf16.mxu0 0
    %1973 = vmatpush1.bf16.msra.mxu0 0
    %1974 = vmatprep.subr.bf16.mxu0 0
    %1975 = vmatpush1.bf16.msra.mxu0 0
    %1976 = vmatprep.subr.bf16.mxu0 0
    %1977 = vmatpush1.bf16.msra.mxu0 0
    %1978 = vmatprep.subr.bf16.mxu0 0
    %1979 = vmatpush1.bf16.msra.mxu0 0
    %1980 = vmatprep.subr.bf16.mxu0 0
    %1981 = vmatpush1.bf16.msra.mxu0 0
    %1982 = vmatprep.subr.bf16.mxu0 0
    %1983 = vmatpush1.bf16.msra.mxu0 0
    %1984 = vmatprep.subr.bf16.mxu0 0
    %1985 = vmatpush1.bf16.msra.mxu0 0
    %1986 = vmatprep.subr.bf16.mxu0 0
    %1987 = vmatpush1.bf16.msra.mxu0 0
    %1988 = vmatprep.subr.bf16.mxu0 0
    %1989 = vmatpush1.bf16.msra.mxu0 0
    %1990 = vmatprep.subr.bf16.mxu0 0
    %1991 = vmatpush1.bf16.msra.mxu0 0
    %1992 = vmatprep.subr.bf16.mxu0 0
    %1993 = vmatpush1.bf16.msra.mxu0 0
    %1994 = vmatprep.subr.bf16.mxu0 0
    %1995 = vmatpush1.bf16.msra.mxu0 0
    %1996 = vmatprep.mubr.bf16.mxu0 0
    %1997 = vmatmul.mubr.bf16.gmra.mrb[0].mxu0 %v1962
    %v1998 = vpop.f32.mrb[0].mxu0
    %v1999 = vadd.f32 0.0, %v1998
    %v2000 = vpop.f32.mrb[0].mxu0
    %v2001 = vpop.f32.mrb[0].mxu0
    %v2002 = vadd.f32 0.0, %v2001
    %v2003 = vpop.f32.mrb[0].mxu0
    %2004 = vdwg.mxu0
    %2005 = vst.msk [vmem:[#allocation4] sm:$0xff] %vm54, %v1999
    %2006 = vst.msk [vmem:[#allocation4 + $0x8] sm:$0xff] %vm54, %v2002
    %2007 = vst.msk [vmem:[#allocation6] sm:$0xff] %vm54, %v50
    %2008 = vst.msk [vmem:[#allocation6 + $0x8] sm:$0xff] %vm54, %v51
    // Predicated region
    $region50: #{tpu_custom_call.1} parent=1 // pred_check
      _
    $region51: #{tpu_custom_call.1} parent=1 // pred_check_branch
      %2010 = sbr.rel (0) target = $region53
    $region52: #{tpu_custom_call.1} parent=1 // pred_region
      %s2012 = ssub.s32 256, 256
      %2013 = vsyncadd [#allocation5], %s2012
      %s2014 = sshll.u32 [#allocation4], 4
      %s2015 = int_to_ptr.vmem [resolvable:$true] %s2014
      %2020 = dma.vmem_to_hbm [thread:$0]  %s2015, 256, %s12, [#allocation5], 128, 128, 8
    $region53: #{tpu_custom_call.1} parent=1 // pred_fallthru
      _
    // Predicated region
    $region54: #{tpu_custom_call.1} parent=1 // pred_check
      _
    $region55: #{tpu_custom_call.1} parent=1 // pred_check_branch
      %2022 = sbr.rel (0) target = $region57
    $region56: #{tpu_custom_call.1} parent=1 // pred_region
      %s2024 = ssub.s32 256, 256
      %2025 = vsyncadd [#allocation7], %s2024
      %s2026 = sshll.u32 [#allocation6], 4
      %s2027 = int_to_ptr.vmem [resolvable:$true] %s2026
      %2032 = dma.vmem_to_hbm [thread:$0]  %s2027, 256, %s13, [#allocation7], 128, 128, 8
    $region57: #{tpu_custom_call.1} parent=1 // pred_fallthru
      _
    // Predicated region
    $region58: #{tpu_custom_call.1} parent=1 // pred_check
      _
    $region59: #{tpu_custom_call.1} parent=1 // pred_check_branch
      %2034 = sbr.rel (0) target = $region61
    $region60: #{tpu_custom_call.1} parent=1 // pred_region
      %2035 = dma.done [#allocation5], 256
    $region61: #{tpu_custom_call.1} parent=1 // pred_fallthru
      _
    // Predicated region
    $region62: #{tpu_custom_call.1} parent=1 // pred_check
      _
    $region63: #{tpu_custom_call.1} parent=1 // pred_check_branch
      %2037 = sbr.rel (0) target = $region65
    $region64: #{tpu_custom_call.1} parent=1 // pred_region
      %2038 = dma.done [#allocation7], 256
    $region65: #{tpu_custom_call.1} parent=1 // pred_fallthru
      _
    %2039 = vsyncpa [#allocation5], 1
    %2040 = vsyncpa [#allocation7], 1

</llo_original>
